<compile_context>
chip_gen: v5e
topology: v5e:2x2
jax: 0.10.0
libtpu: 0.0.40
codegen_flags: <defaults>
</compile_context>

<pallas_src>
import functools

import jax
import jax.numpy as jnp
from jax.experimental import pallas as pl
from jax.experimental.pallas import tpu as pltpu

_MiB = 1024 * 1024
_VMEM_BUDGET = 28 * _MiB  # safe under v7x's 32 MiB scoped default / 64 MiB physical


def _round_up(a: int, b: int) -> int:
    return (a + b - 1) // b * b


# ----------------------------- kernels ---------------------------------------


def _ensemble_kernel_fused(x_ref, w_ref, b_ref, out_ref, *, L, NCp):
    """Single-pass layout: whole feature dim in one sweep, W resident in VMEM.

    x_ref  : (bm, Dp)      bf16   batch tile of flattened input
    w_ref  : (Dp, L*NCp)   bf16   fused weight slab (constant index_map -> resident)
    b_ref  : (1,  L*NCp)   f32    fused bias (padded classes = -1e30)
    out_ref: (bm, NCp)     f32    ensemble-summed probabilities
    """
    for l in range(L):  # L is a small static int -> unrolled, lane-aligned slices
        lo, hi = l * NCp, (l + 1) * NCp
        logits = jnp.dot(
            x_ref[...], w_ref[:, lo:hi], preferred_element_type=jnp.float32
        )
        logits = logits + b_ref[:, lo:hi]
        m = jnp.max(logits, axis=-1, keepdims=True)
        e = jnp.exp(logits - m)                      # padded cols: exp(-1e30-m) == 0
        denom = jnp.sum(e, axis=-1, keepdims=True)
        p = e * pl.reciprocal(denom, approx=True)
        if l == 0:
            out_ref[...] = p
        else:
            out_ref[...] += p


def _ensemble_kernel_tiled(x_ref, w_ref, b_ref, out_ref, acc_ref, *, L, NCp):
    """Tiled-k layout: grid = (batch tiles [parallel], D tiles [arbitrary]).

    x_ref  : (bm, tk)      bf16
    w_ref  : (tk, L*NCp)   bf16
    b_ref  : (1,  L*NCp)   f32
    out_ref: (bm, NCp)     f32   (resident over k)
    acc_ref: (bm, L*NCp)   f32   VMEM scratch holding fused logits
    """
    k = pl.program_id(1)

    @pl.when(k == 0)
    def _():
        # Fold bias into the accumulator init: replaces the zero-init write and
        # removes the full-slab bias add / (bm, L*NCp) temporary in the epilogue.
        acc_ref[...] = jnp.broadcast_to(b_ref[...], acc_ref.shape)

    # One MXU call covering every ensemble member (N = L*NCp), f32 accumulate.
    acc_ref[...] += jnp.dot(
        x_ref[...], w_ref[...], preferred_element_type=jnp.float32
    )

    @pl.when(k == pl.num_programs(1) - 1)
    def _():
        for l in range(L):
            lo, hi = l * NCp, (l + 1) * NCp
            ll = acc_ref[:, lo:hi]                   # bounded (bm, NCp) working set
            m = jnp.max(ll, axis=-1, keepdims=True)
            e = jnp.exp(ll - m)
            denom = jnp.sum(e, axis=-1, keepdims=True)
            p = e * pl.reciprocal(denom, approx=True)
            if l == 0:
                out_ref[...] = p
            else:
                out_ref[...] += p


# ------------------------- parameter packing (one-time) ----------------------


def pack_ensemble_params(weights, biases, *, tk_max=512,
                         single_pass_w_bytes=8 * _MiB):
    """One-time repack of ensemble parameters (hoisted off the per-call path).

    weights: (L, D, NC) f32, biases: (L, NC) f32.
    Returns (w_fused, b_fused, geom) where geom holds the static tiling geometry.
    """
    L, D, NC = weights.shape
    NCp = _round_up(NC, 128)        # lane-dense class dim per member
    LNCp = L * NCp

    Dp_single = _round_up(D, 128)
    # Prefer the single-pass layout when the fused bf16 W slab (double-buffered)
    # comfortably fits the VMEM budget: W is DMA'd once and reused by all batch
    # tiles, no acc read-modify-write per k step.
    single_pass = 2 * Dp_single * LNCp * 2 <= single_pass_w_bytes
    if single_pass:
        Dp = Dp_single
        tk = Dp
    else:
        tk = tk_max                 # multiple of 128
        Dp = _round_up(D, tk)

    # W: (L, D, NC) -> zero-pad -> (Dp, L, NCp) -> (Dp, L*NCp), bf16 stream.
    w_p = jnp.zeros((L, Dp, NCp), jnp.float32).at[:, :D, :NC].set(weights)
    w_fused = jnp.transpose(w_p, (1, 0, 2)).reshape(Dp, LNCp).astype(jnp.bfloat16)

    # Bias stays f32; padded class columns get -1e30 -> ~0 softmax mass.
    b_p = jnp.full((L, NCp), -1e30, jnp.float32).at[:, :NC].set(biases)
    b_fused = b_p.reshape(1, LNCp)

    geom = dict(L=L, D=D, NC=NC, NCp=NCp, LNCp=LNCp, Dp=Dp, tk=tk,
                single_pass=single_pass)
    return w_fused, b_fused, geom


# ------------------------------- forward -------------------------------------


def _choose_bm(B: int, bm_max: int) -> int:
    if B <= 16:
        return 16                                   # bf16 sublane pack (16 rows)
    if B <= 128:
        return _round_up(B, 16)
    return min(_round_up(B, 128), _round_up(bm_max, 128))  # MXU-aligned M


def ensemble_forward(x_nchw, w_fused, b_fused, geom, *, bm_max=512):
    """x_nchw: (B, C, H, W) f32. Returns (B, NC) f32 =
       sum_l softmax(flatten(x) @ W_l + b_l, axis=-1)."""
    L, D, NC = geom["L"], geom["D"], geom["NC"]
    NCp, LNCp, Dp, tk = geom["NCp"], geom["LNCp"], geom["Dp"], geom["tk"]
    single_pass = geom["single_pass"]

    B = x_nchw.shape[0]
    x_flat = x_nchw.reshape(B, -1)
    assert x_flat.shape[1] == D

    bm = _choose_bm(B, bm_max)

    # -------- VMEM footprint model (bf16 streams, f32 acc/out) --------------
    def vmem_single(bm_):
        return (2 * bm_ * Dp * 2          # x, double-buffered
                + 2 * Dp * LNCp * 2       # resident W (count both pipeline bufs)
                + 2 * LNCp * 4            # bias
                + 2 * bm_ * NCp * 4)      # out

    def vmem_tiled(bm_, tk_):
        return (2 * bm_ * tk_ * 2
                + 2 * tk_ * LNCp * 2
                + 2 * LNCp * 4
                + 2 * bm_ * NCp * 4
                + bm_ * LNCp * 4)         # f32 fused-logits accumulator

    if single_pass:
        while vmem_single(bm) > _VMEM_BUDGET and bm > 16:
            bm = max(16, bm // 2)
        vmem_needed = vmem_single(bm)
    else:
        while vmem_tiled(bm, tk) > _VMEM_BUDGET and (tk > 128 or bm > 16):
            if tk > 128:
                tk = max(128, tk // 2)    # tk stays a power-of-two divisor of Dp
            else:
                bm = max(16, bm // 2)
        vmem_needed = vmem_tiled(bm, tk)

    vmem_limit = max(16 * _MiB, min(int(vmem_needed * 1.3) + 2 * _MiB, 64 * _MiB))

    Bp = _round_up(B, bm)
    x_p = (jnp.zeros((Bp, Dp), jnp.float32)
           .at[:B, :D].set(x_flat).astype(jnp.bfloat16))

    if single_pass:
        kernel = functools.partial(_ensemble_kernel_fused, L=L, NCp=NCp)
        grid_spec = pltpu.PrefetchScalarGridSpec(
            num_scalar_prefetch=0,
            grid=(Bp // bm,),
            in_specs=[
                pl.BlockSpec((bm, Dp), lambda i: (i, 0)),      # x tile
                pl.BlockSpec((Dp, LNCp), lambda i: (0, 0)),    # W, resident
                pl.BlockSpec((1, LNCp), lambda i: (0, 0)),     # bias, resident
            ],
            out_specs=pl.BlockSpec((bm, NCp), lambda i: (i, 0)),
        )
        dim_sem = ("parallel",)
    else:
        kernel = functools.partial(_ensemble_kernel_tiled, L=L, NCp=NCp)
        grid_spec = pltpu.PrefetchScalarGridSpec(
            num_scalar_prefetch=0,
            grid=(Bp // bm, Dp // tk),
            in_specs=[
                pl.BlockSpec((bm, tk), lambda i, k: (i, k)),   # x tile
                pl.BlockSpec((tk, LNCp), lambda i, k: (k, 0)),  # fused W slab
                pl.BlockSpec((1, LNCp), lambda i, k: (0, 0)),   # bias, resident
            ],
            out_specs=pl.BlockSpec((bm, NCp), lambda i, k: (i, 0)),  # resident over k
            scratch_shapes=[pltpu.VMEM((bm, LNCp), jnp.float32)],
        )
        dim_sem = ("parallel", "arbitrary")

    out_padded = pl.pallas_call(
        kernel,
        out_shape=jax.ShapeDtypeStruct((Bp, NCp), jnp.float32),
        grid_spec=grid_spec,
        compiler_params=pltpu.CompilerParams(
            dimension_semantics=dim_sem,
            vmem_limit_bytes=vmem_limit,
        ),
    )(x_p, w_fused, b_fused)

    return out_padded[:B, :NC]


# ------------------------------ reference ------------------------------------


def reference_forward(x_nchw, weights, biases):
    B = x_nchw.shape[0]
    L, D, NC = weights.shape
    x_flat = x_nchw.reshape(B, D)
    logits = jnp.einsum("bd,ldn->lbn", x_flat, weights) + biases[:, None, :]
    probs = jax.nn.softmax(logits, axis=-1)
    return jnp.sum(probs, axis=0)


if __name__ == "__main__":
    # Small, ensemble-consistent shapes. num_classes deliberately not lane-aligned
    # to exercise the padding + (-1e30 bias) masking path.
    # TODO(synk): member architecture is resolved via globals()[modelname] in the
    # reference; modeled here as linear classifiers (matmul + softmax hot path).
    B, C, H, W = 2, 4, 16, 16      # NCHW input batch
    L = 3                          # ensemble length
    NUM_CLASSES = 120              # small stand-in for num_classes=1000
    D = C * H * W

    key = jax.random.PRNGKey(0)
    kx, kw, kb = jax.random.split(key, 3)

    x = jax.random.normal(kx, (B, C, H, W), dtype=jnp.float32)
    weights = 0.05 * jax.random.normal(kw, (L, D, NUM_CLASSES), dtype=jnp.float32)
    biases = 0.01 * jax.random.normal(kb, (L, NUM_CLASSES), dtype=jnp.float32)

    ref = jax.block_until_ready(reference_forward(x, weights, biases))

    # --- path 1: single-pass layout (W resident, no k reduction) -------------
    w_fused, b_fused, geom = pack_ensemble_params(weights, biases)
    assert geom["single_pass"]
    out = jax.block_until_ready(ensemble_forward(x, w_fused, b_fused, geom))
    assert out.shape == (B, NUM_CLASSES)
    # bf16 weight/activation streaming vs f32 reference -> modest tolerance.
    assert jnp.allclose(out, ref, atol=2e-3, rtol=2e-2), "single-pass mismatch"
    assert jnp.allclose(jnp.sum(out, axis=-1), jnp.full((B,), float(L)), atol=1e-2)

    # --- path 2: force the tiled-k layout to exercise the reduction kernel ---
    w_fused2, b_fused2, geom2 = pack_ensemble_params(
        weights, biases, tk_max=256, single_pass_w_bytes=0)
    assert not geom2["single_pass"]
    out2 = jax.block_until_ready(ensemble_forward(x, w_fused2, b_fused2, geom2))
    assert jnp.allclose(out2, ref, atol=2e-3, rtol=2e-2), "tiled-k mismatch"
    assert jnp.allclose(jnp.sum(out2, axis=-1), jnp.full((B,), float(L)), atol=1e-2)

    print("KERNEL_OK")
</pallas_src>

<mosaic_0001>
module attributes {stable_mosaic.version = 11 : i64} {
  func.func @_ensemble_kernel_fused(%arg0: i32, %arg1: memref<16x1024xbf16, #tpu.memory_space<vmem>>, %arg2: memref<1024x384xbf16, #tpu.memory_space<vmem>>, %arg3: memref<1x384xf32, #tpu.memory_space<vmem>>, %arg4: memref<16x128xf32, #tpu.memory_space<vmem>>) attributes {dimension_semantics = [#tpu.dimension_semantics<parallel>], iteration_bounds = array<i64: 1>, scalar_prefetch = 0 : i64, scratch_operands = 0 : i64, tpu.core_type = #tpu.core_type<tc>, window_params = [{transform_indices = @transform_0, window_bounds = array<i64: 16, 1024>}, {pipeline_mode = #tpu.pipeline_mode<synchronous>, transform_indices = @transform_1, window_bounds = array<i64: 1024, 384>}, {pipeline_mode = #tpu.pipeline_mode<synchronous>, transform_indices = @transform_2, window_bounds = array<i64: 1, 384>}, {transform_indices = @transform_3, window_bounds = array<i64: 16, 128>}]} {
    %c0 = arith.constant 0 : index
    %c0_0 = arith.constant 0 : index
    %0 = vector.load %arg1[%c0, %c0_0] : memref<16x1024xbf16, #tpu.memory_space<vmem>>, vector<16x1024xbf16>
    %c0_1 = arith.constant 0 : index
    %c0_2 = arith.constant 0 : index
    %1 = vector.load %arg2[%c0_1, %c0_2] : memref<1024x384xbf16, #tpu.memory_space<vmem>>, vector<1024x128xbf16>
    %cst = arith.constant dense<0.000000e+00> : vector<16x128xf32>
    %2 = tpu.matmul %0, %1, %cst {dimension_numbers = #tpu.dot_dimension_numbers<[1], [0], [0], [1], [0, 0, 1, 1], [], []>} : vector<16x1024xbf16>, vector<1024x128xbf16>, vector<16x128xf32> -> vector<16x128xf32>
    %c0_3 = arith.constant 0 : index
    %c0_4 = arith.constant 0 : index
    %3 = vector.load %arg3[%c0_3, %c0_4] : memref<1x384xf32, #tpu.memory_space<vmem>>, vector<1x128xf32>
    %4 = vector.broadcast %3 : vector<1x128xf32> to vector<16x128xf32>
    %5 = arith.addf %2, %4 : vector<16x128xf32>
    %cst_5 = arith.constant dense<0xFF800000> : vector<16xf32>
    %6 = vector.multi_reduction <maximumf>, %5, %cst_5 [1] : vector<16x128xf32> to vector<16xf32>
    %7 = vector.shape_cast %6 : vector<16xf32> to vector<16x1xf32>
    %8 = vector.broadcast %7 : vector<16x1xf32> to vector<16x128xf32>
    %9 = arith.subf %5, %8 : vector<16x128xf32>
    %10 = math.exp %9 : vector<16x128xf32>
    %cst_6 = arith.constant dense<0.000000e+00> : vector<16xf32>
    %11 = vector.multi_reduction <add>, %10, %cst_6 [1] : vector<16x128xf32> to vector<16xf32>
    %12 = vector.shape_cast %11 : vector<16xf32> to vector<16x1xf32>
    %13 = tpu.reciprocal %12 {approx = true} : vector<16x1xf32> -> vector<16x1xf32>
    %14 = vector.broadcast %13 : vector<16x1xf32> to vector<16x128xf32>
    %15 = arith.mulf %10, %14 : vector<16x128xf32>
    %c0_7 = arith.constant 0 : index
    %c0_8 = arith.constant 0 : index
    %16 = vector.load %arg4[%c0_7, %c0_8] : memref<16x128xf32, #tpu.memory_space<vmem>>, vector<16x128xf32>
    tpu.vector_store %arg4[%c0_7, %c0_8], %15 {strides = array<i32>} : memref<16x128xf32, #tpu.memory_space<vmem>>, vector<16x128xf32>,
    %c0_9 = arith.constant 0 : index
    %c0_10 = arith.constant 0 : index
    %17 = vector.load %arg1[%c0_9, %c0_10] : memref<16x1024xbf16, #tpu.memory_space<vmem>>, vector<16x1024xbf16>
    %c0_11 = arith.constant 0 : index
    %c128 = arith.constant 128 : index
    %18 = vector.load %arg2[%c0_11, %c128] : memref<1024x384xbf16, #tpu.memory_space<vmem>>, vector<1024x128xbf16>
    %cst_12 = arith.constant dense<0.000000e+00> : vector<16x128xf32>
    %19 = tpu.matmul %17, %18, %cst_12 {dimension_numbers = #tpu.dot_dimension_numbers<[1], [0], [0], [1], [0, 0, 1, 1], [], []>} : vector<16x1024xbf16>, vector<1024x128xbf16>, vector<16x128xf32> -> vector<16x128xf32>
    %c0_13 = arith.constant 0 : index
    %c128_14 = arith.constant 128 : index
    %20 = vector.load %arg3[%c0_13, %c128_14] : memref<1x384xf32, #tpu.memory_space<vmem>>, vector<1x128xf32>
    %21 = vector.broadcast %20 : vector<1x128xf32> to vector<16x128xf32>
    %22 = arith.addf %19, %21 : vector<16x128xf32>
    %cst_15 = arith.constant dense<0xFF800000> : vector<16xf32>
    %23 = vector.multi_reduction <maximumf>, %22, %cst_15 [1] : vector<16x128xf32> to vector<16xf32>
    %24 = vector.shape_cast %23 : vector<16xf32> to vector<16x1xf32>
    %25 = vector.broadcast %24 : vector<16x1xf32> to vector<16x128xf32>
    %26 = arith.subf %22, %25 : vector<16x128xf32>
    %27 = math.exp %26 : vector<16x128xf32>
    %cst_16 = arith.constant dense<0.000000e+00> : vector<16xf32>
    %28 = vector.multi_reduction <add>, %27, %cst_16 [1] : vector<16x128xf32> to vector<16xf32>
    %29 = vector.shape_cast %28 : vector<16xf32> to vector<16x1xf32>
    %30 = tpu.reciprocal %29 {approx = true} : vector<16x1xf32> -> vector<16x1xf32>
    %31 = vector.broadcast %30 : vector<16x1xf32> to vector<16x128xf32>
    %32 = arith.mulf %27, %31 : vector<16x128xf32>
    %c0_17 = arith.constant 0 : index
    %c0_18 = arith.constant 0 : index
    %33 = vector.load %arg4[%c0_17, %c0_18] : memref<16x128xf32, #tpu.memory_space<vmem>>, vector<16x128xf32>
    %34 = arith.addf %33, %32 : vector<16x128xf32>
    %c0_19 = arith.constant 0 : index
    %c0_20 = arith.constant 0 : index
    %35 = vector.load %arg4[%c0_19, %c0_20] : memref<16x128xf32, #tpu.memory_space<vmem>>, vector<16x128xf32>
    tpu.vector_store %arg4[%c0_19, %c0_20], %34 {strides = array<i32>} : memref<16x128xf32, #tpu.memory_space<vmem>>, vector<16x128xf32>,
    %c0_21 = arith.constant 0 : index
    %c0_22 = arith.constant 0 : index
    %36 = vector.load %arg1[%c0_21, %c0_22] : memref<16x1024xbf16, #tpu.memory_space<vmem>>, vector<16x1024xbf16>
    %c0_23 = arith.constant 0 : index
    %c256 = arith.constant 256 : index
    %37 = vector.load %arg2[%c0_23, %c256] : memref<1024x384xbf16, #tpu.memory_space<vmem>>, vector<1024x128xbf16>
    %cst_24 = arith.constant dense<0.000000e+00> : vector<16x128xf32>
    %38 = tpu.matmul %36, %37, %cst_24 {dimension_numbers = #tpu.dot_dimension_numbers<[1], [0], [0], [1], [0, 0, 1, 1], [], []>} : vector<16x1024xbf16>, vector<1024x128xbf16>, vector<16x128xf32> -> vector<16x128xf32>
    %c0_25 = arith.constant 0 : index
    %c256_26 = arith.constant 256 : index
    %39 = vector.load %arg3[%c0_25, %c256_26] : memref<1x384xf32, #tpu.memory_space<vmem>>, vector<1x128xf32>
    %40 = vector.broadcast %39 : vector<1x128xf32> to vector<16x128xf32>
    %41 = arith.addf %38, %40 : vector<16x128xf32>
    %cst_27 = arith.constant dense<0xFF800000> : vector<16xf32>
    %42 = vector.multi_reduction <maximumf>, %41, %cst_27 [1] : vector<16x128xf32> to vector<16xf32>
    %43 = vector.shape_cast %42 : vector<16xf32> to vector<16x1xf32>
    %44 = vector.broadcast %43 : vector<16x1xf32> to vector<16x128xf32>
    %45 = arith.subf %41, %44 : vector<16x128xf32>
    %46 = math.exp %45 : vector<16x128xf32>
    %cst_28 = arith.constant dense<0.000000e+00> : vector<16xf32>
    %47 = vector.multi_reduction <add>, %46, %cst_28 [1] : vector<16x128xf32> to vector<16xf32>
    %48 = vector.shape_cast %47 : vector<16xf32> to vector<16x1xf32>
    %49 = tpu.reciprocal %48 {approx = true} : vector<16x1xf32> -> vector<16x1xf32>
    %50 = vector.broadcast %49 : vector<16x1xf32> to vector<16x128xf32>
    %51 = arith.mulf %46, %50 : vector<16x128xf32>
    %c0_29 = arith.constant 0 : index
    %c0_30 = arith.constant 0 : index
    %52 = vector.load %arg4[%c0_29, %c0_30] : memref<16x128xf32, #tpu.memory_space<vmem>>, vector<16x128xf32>
    %53 = arith.addf %52, %51 : vector<16x128xf32>
    %c0_31 = arith.constant 0 : index
    %c0_32 = arith.constant 0 : index
    %54 = vector.load %arg4[%c0_31, %c0_32] : memref<16x128xf32, #tpu.memory_space<vmem>>, vector<16x128xf32>
    tpu.vector_store %arg4[%c0_31, %c0_32], %53 {strides = array<i32>} : memref<16x128xf32, #tpu.memory_space<vmem>>, vector<16x128xf32>,
    return
  }
  func.func @transform_0(%arg0: i32) -> (i32, i32) {
    %c0_i32 = arith.constant 0 : i32
    %c0_i32_0 = arith.constant 0 : i32
    return %arg0, %c0_i32 : i32, i32
  }
  func.func @transform_1(%arg0: i32) -> (i32, i32) {
    %c0_i32 = arith.constant 0 : i32
    %c0_i32_0 = arith.constant 0 : i32
    %c0_i32_1 = arith.constant 0 : i32
    return %c0_i32, %c0_i32_0 : i32, i32
  }
  func.func @transform_2(%arg0: i32) -> (i32, i32) {
    %c0_i32 = arith.constant 0 : i32
    %c0_i32_0 = arith.constant 0 : i32
    %c0_i32_1 = arith.constant 0 : i32
    return %c0_i32, %c0_i32_0 : i32, i32
  }
  func.func @transform_3(%arg0: i32) -> (i32, i32) {
    %c0_i32 = arith.constant 0 : i32
    %c0_i32_0 = arith.constant 0 : i32
    return %arg0, %c0_i32 : i32, i32
  }
}

</mosaic_0001>

<llo_original>
// kernel: tpu_custom_call.1
$region0: #{tpu_custom_call.1}
  #allocation0 [shape = 'u32[]', space=smem, size = 0x4, offset = 0x4, fixed_abs, tag = 'smem constant byte address 0x4 - core index']
  #allocation1 [shape = 'u32[72,128]{1,0:T(1,128)}', space=vmem, size = 0x9000, scoped, tag = 'internal scratch']
  %s0 = inlined_call_operand.hbm [shape: bf16[16,1024], index: 0, kind: input, shape index: {}]
  %s1 = inlined_call_operand.hbm [shape: bf16[1024,384], index: 1, kind: input, shape index: {}]
  %s2 = inlined_call_operand.hbm [shape: f32[1,384], index: 2, kind: input, shape index: {}]
  %s3 = inlined_call_operand.hbm [shape: f32[16,128], index: 3, kind: output, shape index: {}]
  %s4 = sld [smem:[#allocation0]]
  $region34: #{tpu_custom_call.1} parent=0
    _
  %s6 = ssub.s32 1, %s4
  %s7 = scalar_select 0, %s6, %s4
  $region1: #{tpu_custom_call.1} parent=0
    #allocation2 [shape = 'u8[32768]{0}', space=vmem, size = 0x8000, scoped, tag = 'input window, operand 0, single buffered']
    #allocation3 [shape = 's32[1]{0}', space=sflag, size = 0x4, scoped, tag = 'scoped memory for tpu_custom_call.1']
    #allocation4 [shape = 's32[1]{0}', space=sflag, size = 0x4, scoped, tag = 'scoped memory for tpu_custom_call.1']
    #allocation5 [shape = 'u8[786432]{0}', space=vmem, size = 0xc0000, scoped, tag = 'input window, operand 1, single buffered']
    #allocation6 [shape = 's32[1]{0}', space=sflag, size = 0x4, scoped, tag = 'scoped memory for tpu_custom_call.1']
    #allocation7 [shape = 'u8[1536]{0}', space=vmem, size = 0x800, scoped, tag = 'input window, operand 2, single buffered']
    #allocation8 [shape = 'u8[8192]{0}', space=vmem, size = 0x2000, scoped, tag = 'output window, operand 0, single buffered']
    %8 = vsyncpa [#allocation3], 0
    %9 = vsyncpa [#allocation6], 0
    %10 = vsyncpa [#allocation4], 0
    // Predicated region
    $region2: #{tpu_custom_call.1} parent=1 // pred_check
      _
    $region3: #{tpu_custom_call.1} parent=1 // pred_check_branch
      %12 = sbr.rel (0) target = $region5
    $region4: #{tpu_custom_call.1} parent=1 // pred_region
      %14 = vsyncadd [#allocation3], 0
      %s15 = sshll.u32 %s0, 4
      %s16 = int_to_ptr.hbm [resolvable:$true] %s15
      %s17 = sshll.u32 [#allocation2], 4
      %s18 = int_to_ptr.vmem [resolvable:$true] %s17
      %23 = dma.hbm_to_vmem [thread:$0]  %s16, 1024, %s18, [#allocation3], 512, 512, 32
    $region5: #{tpu_custom_call.1} parent=1 // pred_fallthru
      _
    // Predicated region
    $region6: #{tpu_custom_call.1} parent=1 // pred_check
      _
    $region7: #{tpu_custom_call.1} parent=1 // pred_check_branch
      %25 = sbr.rel (0) target = $region9
    $region8: #{tpu_custom_call.1} parent=1 // pred_region
      %27 = vsyncadd [#allocation6], 0
      %s28 = sshll.u32 %s1, 4
      %s29 = int_to_ptr.hbm [resolvable:$true] %s28
      %s30 = sshll.u32 [#allocation5], 4
      %s31 = int_to_ptr.vmem [resolvable:$true] %s30
      %36 = dma.hbm_to_vmem [thread:$0]  %s29, 24576, %s31, [#allocation6], 192, 192, 12
    $region9: #{tpu_custom_call.1} parent=1 // pred_fallthru
      _
    // Predicated region
    $region10: #{tpu_custom_call.1} parent=1 // pred_check
      _
    $region11: #{tpu_custom_call.1} parent=1 // pred_check_branch
      %38 = sbr.rel (0) target = $region13
    $region12: #{tpu_custom_call.1} parent=1 // pred_region
      %40 = vsyncadd [#allocation6], 0
      %s42 = sshll.u32 %s2, 4
      %s43 = int_to_ptr.hbm [resolvable:$true] %s42
      %s44 = sshll.u32 [#allocation7], 4
      %s45 = int_to_ptr.vmem [resolvable:$true] %s44
      %47 = dma.hbm_to_vmem [thread:$0]  %s43, 48, %s45, [#allocation6]
    $region13: #{tpu_custom_call.1} parent=1 // pred_fallthru
      _
    // Predicated region
    $region14: #{tpu_custom_call.1} parent=1 // pred_check
      _
    $region15: #{tpu_custom_call.1} parent=1 // pred_check_branch
      %49 = sbr.rel (0) target = $region17
    $region16: #{tpu_custom_call.1} parent=1 // pred_region
      %51 = dma.done [#allocation3], 1024
    $region17: #{tpu_custom_call.1} parent=1 // pred_fallthru
      _
    // Predicated region
    $region18: #{tpu_custom_call.1} parent=1 // pred_check
      _
    $region19: #{tpu_custom_call.1} parent=1 // pred_check_branch
      %53 = sbr.rel (0) target = $region21
    $region20: #{tpu_custom_call.1} parent=1 // pred_region
      %55 = dma.done [#allocation6], 24576
    $region21: #{tpu_custom_call.1} parent=1 // pred_fallthru
      _
    // Predicated region
    $region22: #{tpu_custom_call.1} parent=1 // pred_check
      _
    $region23: #{tpu_custom_call.1} parent=1 // pred_check_branch
      %57 = sbr.rel (0) target = $region25
    $region24: #{tpu_custom_call.1} parent=1 // pred_region
      %59 = dma.done [#allocation6], 48
    $region25: #{tpu_custom_call.1} parent=1 // pred_fallthru
      _
    %v60 = vld [vmem:[#allocation2] sm:$0xff]
    %v61 = vld [vmem:[#allocation2 + $0x8] sm:$0xff]
    %v62 = vld [vmem:[#allocation2 + $0x10] sm:$0xff]
    %v63 = vld [vmem:[#allocation2 + $0x18] sm:$0xff]
    %v64 = vld [vmem:[#allocation2 + $0x20] sm:$0xff]
    %v65 = vld [vmem:[#allocation2 + $0x28] sm:$0xff]
    %v66 = vld [vmem:[#allocation2 + $0x30] sm:$0xff]
    %v67 = vld [vmem:[#allocation2 + $0x38] sm:$0xff]
    %v68 = vld [vmem:[#allocation5] sm:$0xf]
    %v69 = vld [vmem:[#allocation5 + $0xc] sm:$0xf]
    %v70 = vld [vmem:[#allocation5 + $0x18] sm:$0xf]
    %v71 = vld [vmem:[#allocation5 + $0x24] sm:$0xf]
    %v72 = vld [vmem:[#allocation5 + $0x30] sm:$0xf]
    %v73 = vld [vmem:[#allocation5 + $0x3c] sm:$0xf]
    %v74 = vld [vmem:[#allocation5 + $0x48] sm:$0xf]
    %v75 = vld [vmem:[#allocation5 + $0x54] sm:$0xf]
    %v76 = vld [vmem:[#allocation5 + $0x60] sm:$0xf]
    %v77 = vld [vmem:[#allocation5 + $0x6c] sm:$0xf]
    %v78 = vld [vmem:[#allocation5 + $0x78] sm:$0xf]
    %v79 = vld [vmem:[#allocation5 + $0x84] sm:$0xf]
    %v80 = vld [vmem:[#allocation5 + $0x90] sm:$0xf]
    %v81 = vld [vmem:[#allocation5 + $0x9c] sm:$0xf]
    %v82 = vld [vmem:[#allocation5 + $0xa8] sm:$0xf]
    %v83 = vld [vmem:[#allocation5 + $0xb4] sm:$0xf]
    %v84 = vld [vmem:[#allocation5 + $0xc0] sm:$0xf]
    %v85 = vld [vmem:[#allocation5 + $0xcc] sm:$0xf]
    %v86 = vld [vmem:[#allocation5 + $0xd8] sm:$0xf]
    %v87 = vld [vmem:[#allocation5 + $0xe4] sm:$0xf]
    %v88 = vld [vmem:[#allocation5 + $0xf0] sm:$0xf]
    %v89 = vld [vmem:[#allocation5 + $0xfc] sm:$0xf]
    %v90 = vld [vmem:[#allocation5 + $0x108] sm:$0xf]
    %v91 = vld [vmem:[#allocation5 + $0x114] sm:$0xf]
    %v92 = vld [vmem:[#allocation5 + $0x120] sm:$0xf]
    %v93 = vld [vmem:[#allocation5 + $0x12c] sm:$0xf]
    %v94 = vld [vmem:[#allocation5 + $0x138] sm:$0xf]
    %v95 = vld [vmem:[#allocation5 + $0x144] sm:$0xf]
    %v96 = vld [vmem:[#allocation5 + $0x150] sm:$0xf]
    %v97 = vld [vmem:[#allocation5 + $0x15c] sm:$0xf]
    %v98 = vld [vmem:[#allocation5 + $0x168] sm:$0xf]
    %v99 = vld [vmem:[#allocation5 + $0x174] sm:$0xf]
    %v100 = vld [vmem:[#allocation5 + $0x180] sm:$0xf]
    %v101 = vld [vmem:[#allocation5 + $0x18c] sm:$0xf]
    %v102 = vld [vmem:[#allocation5 + $0x198] sm:$0xf]
    %v103 = vld [vmem:[#allocation5 + $0x1a4] sm:$0xf]
    %v104 = vld [vmem:[#allocation5 + $0x1b0] sm:$0xf]
    %v105 = vld [vmem:[#allocation5 + $0x1bc] sm:$0xf]
    %v106 = vld [vmem:[#allocation5 + $0x1c8] sm:$0xf]
    %v107 = vld [vmem:[#allocation5 + $0x1d4] sm:$0xf]
    %v108 = vld [vmem:[#allocation5 + $0x1e0] sm:$0xf]
    %v109 = vld [vmem:[#allocation5 + $0x1ec] sm:$0xf]
    %v110 = vld [vmem:[#allocation5 + $0x1f8] sm:$0xf]
    %v111 = vld [vmem:[#allocation5 + $0x204] sm:$0xf]
    %v112 = vld [vmem:[#allocation5 + $0x210] sm:$0xf]
    %v113 = vld [vmem:[#allocation5 + $0x21c] sm:$0xf]
    %v114 = vld [vmem:[#allocation5 + $0x228] sm:$0xf]
    %v115 = vld [vmem:[#allocation5 + $0x234] sm:$0xf]
    %v116 = vld [vmem:[#allocation5 + $0x240] sm:$0xf]
    %v117 = vld [vmem:[#allocation5 + $0x24c] sm:$0xf]
    %v118 = vld [vmem:[#allocation5 + $0x258] sm:$0xf]
    %v119 = vld [vmem:[#allocation5 + $0x264] sm:$0xf]
    %v120 = vld [vmem:[#allocation5 + $0x270] sm:$0xf]
    %v121 = vld [vmem:[#allocation5 + $0x27c] sm:$0xf]
    %v122 = vld [vmem:[#allocation5 + $0x288] sm:$0xf]
    %v123 = vld [vmem:[#allocation5 + $0x294] sm:$0xf]
    %v124 = vld [vmem:[#allocation5 + $0x2a0] sm:$0xf]
    %v125 = vld [vmem:[#allocation5 + $0x2ac] sm:$0xf]
    %v126 = vld [vmem:[#allocation5 + $0x2b8] sm:$0xf]
    %v127 = vld [vmem:[#allocation5 + $0x2c4] sm:$0xf]
    %v128 = vld [vmem:[#allocation5 + $0x2d0] sm:$0xf]
    %v129 = vld [vmem:[#allocation5 + $0x2dc] sm:$0xf]
    %v130 = vld [vmem:[#allocation5 + $0x2e8] sm:$0xf]
    %v131 = vld [vmem:[#allocation5 + $0x2f4] sm:$0xf]
    %v132 = vld [vmem:[#allocation5 + $0x300] sm:$0xf]
    %v133 = vld [vmem:[#allocation5 + $0x30c] sm:$0xf]
    %v134 = vld [vmem:[#allocation5 + $0x318] sm:$0xf]
    %v135 = vld [vmem:[#allocation5 + $0x324] sm:$0xf]
    %v136 = vld [vmem:[#allocation5 + $0x330] sm:$0xf]
    %v137 = vld [vmem:[#allocation5 + $0x33c] sm:$0xf]
    %v138 = vld [vmem:[#allocation5 + $0x348] sm:$0xf]
    %v139 = vld [vmem:[#allocation5 + $0x354] sm:$0xf]
    %v140 = vld [vmem:[#allocation5 + $0x360] sm:$0xf]
    %v141 = vld [vmem:[#allocation5 + $0x36c] sm:$0xf]
    %v142 = vld [vmem:[#allocation5 + $0x378] sm:$0xf]
    %v143 = vld [vmem:[#allocation5 + $0x384] sm:$0xf]
    %v144 = vld [vmem:[#allocation5 + $0x390] sm:$0xf]
    %v145 = vld [vmem:[#allocation5 + $0x39c] sm:$0xf]
    %v146 = vld [vmem:[#allocation5 + $0x3a8] sm:$0xf]
    %v147 = vld [vmem:[#allocation5 + $0x3b4] sm:$0xf]
    %v148 = vld [vmem:[#allocation5 + $0x3c0] sm:$0xf]
    %v149 = vld [vmem:[#allocation5 + $0x3cc] sm:$0xf]
    %v150 = vld [vmem:[#allocation5 + $0x3d8] sm:$0xf]
    %v151 = vld [vmem:[#allocation5 + $0x3e4] sm:$0xf]
    %v152 = vld [vmem:[#allocation5 + $0x3f0] sm:$0xf]
    %v153 = vld [vmem:[#allocation5 + $0x3fc] sm:$0xf]
    %v154 = vld [vmem:[#allocation5 + $0x408] sm:$0xf]
    %v155 = vld [vmem:[#allocation5 + $0x414] sm:$0xf]
    %v156 = vld [vmem:[#allocation5 + $0x420] sm:$0xf]
    %v157 = vld [vmem:[#allocation5 + $0x42c] sm:$0xf]
    %v158 = vld [vmem:[#allocation5 + $0x438] sm:$0xf]
    %v159 = vld [vmem:[#allocation5 + $0x444] sm:$0xf]
    %v160 = vld [vmem:[#allocation5 + $0x450] sm:$0xf]
    %v161 = vld [vmem:[#allocation5 + $0x45c] sm:$0xf]
    %v162 = vld [vmem:[#allocation5 + $0x468] sm:$0xf]
    %v163 = vld [vmem:[#allocation5 + $0x474] sm:$0xf]
    %v164 = vld [vmem:[#allocation5 + $0x480] sm:$0xf]
    %v165 = vld [vmem:[#allocation5 + $0x48c] sm:$0xf]
    %v166 = vld [vmem:[#allocation5 + $0x498] sm:$0xf]
    %v167 = vld [vmem:[#allocation5 + $0x4a4] sm:$0xf]
    %v168 = vld [vmem:[#allocation5 + $0x4b0] sm:$0xf]
    %v169 = vld [vmem:[#allocation5 + $0x4bc] sm:$0xf]
    %v170 = vld [vmem:[#allocation5 + $0x4c8] sm:$0xf]
    %v171 = vld [vmem:[#allocation5 + $0x4d4] sm:$0xf]
    %v172 = vld [vmem:[#allocation5 + $0x4e0] sm:$0xf]
    %v173 = vld [vmem:[#allocation5 + $0x4ec] sm:$0xf]
    %v174 = vld [vmem:[#allocation5 + $0x4f8] sm:$0xf]
    %v175 = vld [vmem:[#allocation5 + $0x504] sm:$0xf]
    %v176 = vld [vmem:[#allocation5 + $0x510] sm:$0xf]
    %v177 = vld [vmem:[#allocation5 + $0x51c] sm:$0xf]
    %v178 = vld [vmem:[#allocation5 + $0x528] sm:$0xf]
    %v179 = vld [vmem:[#allocation5 + $0x534] sm:$0xf]
    %v180 = vld [vmem:[#allocation5 + $0x540] sm:$0xf]
    %v181 = vld [vmem:[#allocation5 + $0x54c] sm:$0xf]
    %v182 = vld [vmem:[#allocation5 + $0x558] sm:$0xf]
    %v183 = vld [vmem:[#allocation5 + $0x564] sm:$0xf]
    %v184 = vld [vmem:[#allocation5 + $0x570] sm:$0xf]
    %v185 = vld [vmem:[#allocation5 + $0x57c] sm:$0xf]
    %v186 = vld [vmem:[#allocation5 + $0x588] sm:$0xf]
    %v187 = vld [vmem:[#allocation5 + $0x594] sm:$0xf]
    %v188 = vld [vmem:[#allocation5 + $0x5a0] sm:$0xf]
    %v189 = vld [vmem:[#allocation5 + $0x5ac] sm:$0xf]
    %v190 = vld [vmem:[#allocation5 + $0x5b8] sm:$0xf]
    %v191 = vld [vmem:[#allocation5 + $0x5c4] sm:$0xf]
    %v192 = vld [vmem:[#allocation5 + $0x5d0] sm:$0xf]
    %v193 = vld [vmem:[#allocation5 + $0x5dc] sm:$0xf]
    %v194 = vld [vmem:[#allocation5 + $0x5e8] sm:$0xf]
    %v195 = vld [vmem:[#allocation5 + $0x5f4] sm:$0xf]
    %v196 = vld [vmem:[#allocation7] sm:$0x1]
    %v198 = vperm.slane %v196, 0
    %v208 = vunpack.c.l.b16 %v60
    %v209 = vunpack.c.h.b16 %v60
    %v210 = vunpack.c.l.b16 %v61
    %v211 = vunpack.c.h.b16 %v61
    %v212 = vunpack.c.l.b16 %v62
    %v213 = vunpack.c.h.b16 %v62
    %v214 = vunpack.c.l.b16 %v63
    %v215 = vunpack.c.h.b16 %v63
    %v216 = vunpack.c.l.b16 %v64
    %v217 = vunpack.c.h.b16 %v64
    %v218 = vunpack.c.l.b16 %v65
    %v219 = vunpack.c.h.b16 %v65
    %v220 = vunpack.c.l.b16 %v66
    %v221 = vunpack.c.h.b16 %v66
    %v222 = vunpack.c.l.b16 %v67
    %v223 = vunpack.c.h.b16 %v67
    %v224 = vpack.c.b16 %v216, %v208
    %v225 = vpack.c.b16 %v217, %v209
    %v226 = vpack.c.b16 %v218, %v210
    %v227 = vpack.c.b16 %v219, %v211
    %v228 = vpack.c.b16 %v220, %v212
    %v229 = vpack.c.b16 %v221, %v213
    %v230 = vpack.c.b16 %v222, %v214
    %v231 = vpack.c.b16 %v223, %v215
    %v368 = vunpack.c.l.b16 %v68
    %v369 = vunpack.c.l.b16 %v69
    %v370 = vunpack.c.l.b16 %v70
    %v371 = vunpack.c.l.b16 %v71
    %v372 = vunpack.c.l.b16 %v72
    %v373 = vunpack.c.l.b16 %v73
    %v374 = vunpack.c.l.b16 %v74
    %v375 = vunpack.c.l.b16 %v75
    %v376 = vunpack.c.l.b16 %v76
    %v377 = vunpack.c.l.b16 %v77
    %v378 = vunpack.c.l.b16 %v78
    %v379 = vunpack.c.l.b16 %v79
    %v380 = vunpack.c.l.b16 %v80
    %v381 = vunpack.c.l.b16 %v81
    %v382 = vunpack.c.l.b16 %v82
    %v383 = vunpack.c.l.b16 %v83
    %v384 = vunpack.c.l.b16 %v84
    %v385 = vunpack.c.l.b16 %v85
    %v386 = vunpack.c.l.b16 %v86
    %v387 = vunpack.c.l.b16 %v87
    %v388 = vunpack.c.l.b16 %v88
    %v389 = vunpack.c.l.b16 %v89
    %v390 = vunpack.c.l.b16 %v90
    %v391 = vunpack.c.l.b16 %v91
    %v392 = vunpack.c.l.b16 %v92
    %v393 = vunpack.c.l.b16 %v93
    %v394 = vunpack.c.l.b16 %v94
    %v395 = vunpack.c.l.b16 %v95
    %v396 = vunpack.c.l.b16 %v96
    %v397 = vunpack.c.l.b16 %v97
    %v398 = vunpack.c.l.b16 %v98
    %v399 = vunpack.c.l.b16 %v99
    %v400 = vunpack.c.l.b16 %v100
    %v401 = vunpack.c.l.b16 %v101
    %v402 = vunpack.c.l.b16 %v102
    %v403 = vunpack.c.l.b16 %v103
    %v404 = vunpack.c.l.b16 %v104
    %v405 = vunpack.c.l.b16 %v105
    %v406 = vunpack.c.l.b16 %v106
    %v407 = vunpack.c.l.b16 %v107
    %v408 = vunpack.c.l.b16 %v108
    %v409 = vunpack.c.l.b16 %v109
    %v410 = vunpack.c.l.b16 %v110
    %v411 = vunpack.c.l.b16 %v111
    %v412 = vunpack.c.l.b16 %v112
    %v413 = vunpack.c.l.b16 %v113
    %v414 = vunpack.c.l.b16 %v114
    %v415 = vunpack.c.l.b16 %v115
    %v416 = vunpack.c.l.b16 %v116
    %v417 = vunpack.c.l.b16 %v117
    %v418 = vunpack.c.l.b16 %v118
    %v419 = vunpack.c.l.b16 %v119
    %v420 = vunpack.c.l.b16 %v120
    %v421 = vunpack.c.l.b16 %v121
    %v422 = vunpack.c.l.b16 %v122
    %v423 = vunpack.c.l.b16 %v123
    %v424 = vunpack.c.l.b16 %v124
    %v425 = vunpack.c.l.b16 %v125
    %v426 = vunpack.c.l.b16 %v126
    %v427 = vunpack.c.l.b16 %v127
    %v428 = vunpack.c.l.b16 %v128
    %v429 = vunpack.c.l.b16 %v129
    %v430 = vunpack.c.l.b16 %v130
    %v431 = vunpack.c.l.b16 %v131
    %v432 = vunpack.c.l.b16 %v132
    %v433 = vunpack.c.l.b16 %v133
    %v434 = vunpack.c.l.b16 %v134
    %v435 = vunpack.c.l.b16 %v135
    %v436 = vunpack.c.l.b16 %v136
    %v437 = vunpack.c.l.b16 %v137
    %v438 = vunpack.c.l.b16 %v138
    %v439 = vunpack.c.l.b16 %v139
    %v440 = vunpack.c.l.b16 %v140
    %v441 = vunpack.c.l.b16 %v141
    %v442 = vunpack.c.l.b16 %v142
    %v443 = vunpack.c.l.b16 %v143
    %v444 = vunpack.c.l.b16 %v144
    %v445 = vunpack.c.l.b16 %v145
    %v446 = vunpack.c.l.b16 %v146
    %v447 = vunpack.c.l.b16 %v147
    %v448 = vunpack.c.l.b16 %v148
    %v449 = vunpack.c.l.b16 %v149
    %v450 = vunpack.c.l.b16 %v150
    %v451 = vunpack.c.l.b16 %v151
    %v452 = vunpack.c.l.b16 %v152
    %v453 = vunpack.c.l.b16 %v153
    %v454 = vunpack.c.l.b16 %v154
    %v455 = vunpack.c.l.b16 %v155
    %v456 = vunpack.c.l.b16 %v156
    %v457 = vunpack.c.l.b16 %v157
    %v458 = vunpack.c.l.b16 %v158
    %v459 = vunpack.c.l.b16 %v159
    %v460 = vunpack.c.l.b16 %v160
    %v461 = vunpack.c.l.b16 %v161
    %v462 = vunpack.c.l.b16 %v162
    %v463 = vunpack.c.l.b16 %v163
    %v464 = vunpack.c.l.b16 %v164
    %v465 = vunpack.c.l.b16 %v165
    %v466 = vunpack.c.l.b16 %v166
    %v467 = vunpack.c.l.b16 %v167
    %v468 = vunpack.c.l.b16 %v168
    %v469 = vunpack.c.l.b16 %v169
    %v470 = vunpack.c.l.b16 %v170
    %v471 = vunpack.c.l.b16 %v171
    %v472 = vunpack.c.l.b16 %v172
    %v473 = vunpack.c.l.b16 %v173
    %v474 = vunpack.c.l.b16 %v174
    %v475 = vunpack.c.l.b16 %v175
    %v476 = vunpack.c.l.b16 %v176
    %v477 = vunpack.c.l.b16 %v177
    %v478 = vunpack.c.l.b16 %v178
    %v479 = vunpack.c.l.b16 %v179
    %v480 = vunpack.c.l.b16 %v180
    %v481 = vunpack.c.l.b16 %v181
    %v482 = vunpack.c.l.b16 %v182
    %v483 = vunpack.c.l.b16 %v183
    %v484 = vunpack.c.l.b16 %v184
    %v485 = vunpack.c.l.b16 %v185
    %v486 = vunpack.c.l.b16 %v186
    %v487 = vunpack.c.l.b16 %v187
    %v488 = vunpack.c.l.b16 %v188
    %v489 = vunpack.c.l.b16 %v189
    %v490 = vunpack.c.l.b16 %v190
    %v491 = vunpack.c.l.b16 %v191
    %v492 = vunpack.c.l.b16 %v192
    %v493 = vunpack.c.l.b16 %v193
    %v494 = vunpack.c.l.b16 %v194
    %v495 = vunpack.c.l.b16 %v195
    %v496 = vpack.c.b16 %v369, %v368
    %v497 = vpack.c.b16 %v371, %v370
    %v498 = vpack.c.b16 %v373, %v372
    %v499 = vpack.c.b16 %v375, %v374
    %v500 = vpack.c.b16 %v377, %v376
    %v501 = vpack.c.b16 %v379, %v378
    %v502 = vpack.c.b16 %v381, %v380
    %v503 = vpack.c.b16 %v383, %v382
    %v504 = vpack.c.b16 %v385, %v384
    %v505 = vpack.c.b16 %v387, %v386
    %v506 = vpack.c.b16 %v389, %v388
    %v507 = vpack.c.b16 %v391, %v390
    %v508 = vpack.c.b16 %v393, %v392
    %v509 = vpack.c.b16 %v395, %v394
    %v510 = vpack.c.b16 %v397, %v396
    %v511 = vpack.c.b16 %v399, %v398
    %v512 = vpack.c.b16 %v401, %v400
    %v513 = vpack.c.b16 %v403, %v402
    %v514 = vpack.c.b16 %v405, %v404
    %v515 = vpack.c.b16 %v407, %v406
    %v516 = vpack.c.b16 %v409, %v408
    %v517 = vpack.c.b16 %v411, %v410
    %v518 = vpack.c.b16 %v413, %v412
    %v519 = vpack.c.b16 %v415, %v414
    %v520 = vpack.c.b16 %v417, %v416
    %v521 = vpack.c.b16 %v419, %v418
    %v522 = vpack.c.b16 %v421, %v420
    %v523 = vpack.c.b16 %v423, %v422
    %v524 = vpack.c.b16 %v425, %v424
    %v525 = vpack.c.b16 %v427, %v426
    %v526 = vpack.c.b16 %v429, %v428
    %v527 = vpack.c.b16 %v431, %v430
    %v528 = vpack.c.b16 %v433, %v432
    %v529 = vpack.c.b16 %v435, %v434
    %v530 = vpack.c.b16 %v437, %v436
    %v531 = vpack.c.b16 %v439, %v438
    %v532 = vpack.c.b16 %v441, %v440
    %v533 = vpack.c.b16 %v443, %v442
    %v534 = vpack.c.b16 %v445, %v444
    %v535 = vpack.c.b16 %v447, %v446
    %v536 = vpack.c.b16 %v449, %v448
    %v537 = vpack.c.b16 %v451, %v450
    %v538 = vpack.c.b16 %v453, %v452
    %v539 = vpack.c.b16 %v455, %v454
    %v540 = vpack.c.b16 %v457, %v456
    %v541 = vpack.c.b16 %v459, %v458
    %v542 = vpack.c.b16 %v461, %v460
    %v543 = vpack.c.b16 %v463, %v462
    %v544 = vpack.c.b16 %v465, %v464
    %v545 = vpack.c.b16 %v467, %v466
    %v546 = vpack.c.b16 %v469, %v468
    %v547 = vpack.c.b16 %v471, %v470
    %v548 = vpack.c.b16 %v473, %v472
    %v549 = vpack.c.b16 %v475, %v474
    %v550 = vpack.c.b16 %v477, %v476
    %v551 = vpack.c.b16 %v479, %v478
    %v552 = vpack.c.b16 %v481, %v480
    %v553 = vpack.c.b16 %v483, %v482
    %v554 = vpack.c.b16 %v485, %v484
    %v555 = vpack.c.b16 %v487, %v486
    %v556 = vpack.c.b16 %v489, %v488
    %v557 = vpack.c.b16 %v491, %v490
    %v558 = vpack.c.b16 %v493, %v492
    %v559 = vpack.c.b16 %v495, %v494
    %624 = vmatpush.bf16.msra.mxu0 %v503
    %625 = vmatpush.bf16.msra.mxu0 %v502
    %626 = vmatpush.bf16.msra.mxu0 %v501
    %627 = vmatpush.bf16.msra.mxu0 %v500
    %628 = vmatpush.bf16.msra.mxu0 %v499
    %629 = vmatpush.bf16.msra.mxu0 %v498
    %630 = vmatpush.bf16.msra.mxu0 %v497
    %631 = vmatpush.bf16.msra.mxu0 %v496
    %632 = vmatmul.bf16.gmra.mxu0 %v224
    %v633 = vpop.f32.mrf.mxu0
    %v634 = vadd.f32 %v198, %v633
    %v635 = vpop.f32.mrf.mxu0
    %v636 = vadd.f32 %v198, %v635
    %637 = vdwg.mxu0
    %638 = vmatpush.bf16.msra.mxu0 %v511
    %639 = vmatpush.bf16.msra.mxu0 %v510
    %640 = vmatpush.bf16.msra.mxu0 %v509
    %641 = vmatpush.bf16.msra.mxu0 %v508
    %642 = vmatpush.bf16.msra.mxu0 %v507
    %643 = vmatpush.bf16.msra.mxu0 %v506
    %644 = vmatpush.bf16.msra.mxu0 %v505
    %645 = vmatpush.bf16.msra.mxu0 %v504
    %646 = vmatmul.bf16.gmra.mxu0 %v225
    %v647 = vpop.f32.mrf.mxu0
    %v648 = vadd.f32 %v634, %v647
    %v649 = vpop.f32.mrf.mxu0
    %v650 = vadd.f32 %v636, %v649
    %651 = vdwg.mxu0
    %652 = vmatpush.bf16.msra.mxu0 %v519
    %653 = vmatpush.bf16.msra.mxu0 %v518
    %654 = vmatpush.bf16.msra.mxu0 %v517
    %655 = vmatpush.bf16.msra.mxu0 %v516
    %656 = vmatpush.bf16.msra.mxu0 %v515
    %657 = vmatpush.bf16.msra.mxu0 %v514
    %658 = vmatpush.bf16.msra.mxu0 %v513
    %659 = vmatpush.bf16.msra.mxu0 %v512
    %660 = vmatmul.bf16.gmra.mxu0 %v226
    %v661 = vpop.f32.mrf.mxu0
    %v662 = vadd.f32 %v648, %v661
    %v663 = vpop.f32.mrf.mxu0
    %v664 = vadd.f32 %v650, %v663
    %665 = vdwg.mxu0
    %666 = vmatpush.bf16.msra.mxu0 %v527
    %667 = vmatpush.bf16.msra.mxu0 %v526
    %668 = vmatpush.bf16.msra.mxu0 %v525
    %669 = vmatpush.bf16.msra.mxu0 %v524
    %670 = vmatpush.bf16.msra.mxu0 %v523
    %671 = vmatpush.bf16.msra.mxu0 %v522
    %672 = vmatpush.bf16.msra.mxu0 %v521
    %673 = vmatpush.bf16.msra.mxu0 %v520
    %674 = vmatmul.bf16.gmra.mxu0 %v227
    %v675 = vpop.f32.mrf.mxu0
    %v676 = vadd.f32 %v662, %v675
    %v677 = vpop.f32.mrf.mxu0
    %v678 = vadd.f32 %v664, %v677
    %679 = vdwg.mxu0
    %680 = vmatpush.bf16.msra.mxu0 %v535
    %681 = vmatpush.bf16.msra.mxu0 %v534
    %682 = vmatpush.bf16.msra.mxu0 %v533
    %683 = vmatpush.bf16.msra.mxu0 %v532
    %684 = vmatpush.bf16.msra.mxu0 %v531
    %685 = vmatpush.bf16.msra.mxu0 %v530
    %686 = vmatpush.bf16.msra.mxu0 %v529
    %687 = vmatpush.bf16.msra.mxu0 %v528
    %688 = vmatmul.bf16.gmra.mxu0 %v228
    %v689 = vpop.f32.mrf.mxu0
    %v690 = vadd.f32 %v676, %v689
    %v691 = vpop.f32.mrf.mxu0
    %v692 = vadd.f32 %v678, %v691
    %693 = vdwg.mxu0
    %694 = vmatpush.bf16.msra.mxu0 %v543
    %695 = vmatpush.bf16.msra.mxu0 %v542
    %696 = vmatpush.bf16.msra.mxu0 %v541
    %697 = vmatpush.bf16.msra.mxu0 %v540
    %698 = vmatpush.bf16.msra.mxu0 %v539
    %699 = vmatpush.bf16.msra.mxu0 %v538
    %700 = vmatpush.bf16.msra.mxu0 %v537
    %701 = vmatpush.bf16.msra.mxu0 %v536
    %702 = vmatmul.bf16.gmra.mxu0 %v229
    %v703 = vpop.f32.mrf.mxu0
    %v704 = vadd.f32 %v690, %v703
    %v705 = vpop.f32.mrf.mxu0
    %v706 = vadd.f32 %v692, %v705
    %707 = vdwg.mxu0
    %708 = vmatpush.bf16.msra.mxu0 %v551
    %709 = vmatpush.bf16.msra.mxu0 %v550
    %710 = vmatpush.bf16.msra.mxu0 %v549
    %711 = vmatpush.bf16.msra.mxu0 %v548
    %712 = vmatpush.bf16.msra.mxu0 %v547
    %713 = vmatpush.bf16.msra.mxu0 %v546
    %714 = vmatpush.bf16.msra.mxu0 %v545
    %715 = vmatpush.bf16.msra.mxu0 %v544
    %716 = vmatmul.bf16.gmra.mxu0 %v230
    %v717 = vpop.f32.mrf.mxu0
    %v718 = vadd.f32 %v704, %v717
    %v719 = vpop.f32.mrf.mxu0
    %v720 = vadd.f32 %v706, %v719
    %721 = vdwg.mxu0
    %722 = vmatpush.bf16.msra.mxu0 %v559
    %723 = vmatpush.bf16.msra.mxu0 %v558
    %724 = vmatpush.bf16.msra.mxu0 %v557
    %725 = vmatpush.bf16.msra.mxu0 %v556
    %726 = vmatpush.bf16.msra.mxu0 %v555
    %727 = vmatpush.bf16.msra.mxu0 %v554
    %728 = vmatpush.bf16.msra.mxu0 %v553
    %729 = vmatpush.bf16.msra.mxu0 %v552
    %730 = vmatmul.bf16.gmra.mxu0 %v231
    %v731 = vpop.f32.mrf.mxu0
    %v732 = vadd.f32 %v718, %v731
    %v733 = vpop.f32.mrf.mxu0
    %v734 = vadd.f32 %v720, %v733
    %735 = vdwg.mxu0
    %736 = vmax.xlane.f32.xlu0 %v732
    %v737 = vpop.xlane.xlu0 %736
    %738 = vmax.xlane.f32.xlu0 %v734
    %v739 = vpop.xlane.xlu0 %738
    %v740 = vsub.f32 %v732, %v737
    %v741 = vsub.f32 %v734, %v739
    %v742 = vmul.f32 %v740, 1.442695
    %v743 = vpow.pop %v742
    %v744 = vmul.f32 %v741, 1.442695
    %v745 = vpow.pop %v744
    %746 = vadd.xlane.f32.xlu0 %v743
    %v747 = vpop.xlane.xlu0 %746
    %748 = vadd.xlane.f32.xlu0 %v745
    %v749 = vpop.xlane.xlu0 %748
    %v750 = vrcp.pop %v747
    %v751 = vrcp.pop %v749
    %v752 = vmul.f32 %v743, %v750
    %v753 = vmul.f32 %v745, %v751
    %754 = vst [vmem:[#allocation8] sm:$0xff] %v752
    %755 = vst [vmem:[#allocation8 + $0x8] sm:$0xff] %v753
    %v756 = vld [vmem:[#allocation2] sm:$0xff]
    %v757 = vld [vmem:[#allocation2 + $0x8] sm:$0xff]
    %v758 = vld [vmem:[#allocation2 + $0x10] sm:$0xff]
    %v759 = vld [vmem:[#allocation2 + $0x18] sm:$0xff]
    %v760 = vld [vmem:[#allocation2 + $0x20] sm:$0xff]
    %v761 = vld [vmem:[#allocation2 + $0x28] sm:$0xff]
    %v762 = vld [vmem:[#allocation2 + $0x30] sm:$0xff]
    %v763 = vld [vmem:[#allocation2 + $0x38] sm:$0xff]
    %v764 = vld [vmem:[#allocation5 + $0x4] sm:$0xf]
    %v765 = vld [vmem:[#allocation5 + $0x10] sm:$0xf]
    %v766 = vld [vmem:[#allocation5 + $0x1c] sm:$0xf]
    %v767 = vld [vmem:[#allocation5 + $0x28] sm:$0xf]
    %v768 = vld [vmem:[#allocation5 + $0x34] sm:$0xf]
    %v769 = vld [vmem:[#allocation5 + $0x40] sm:$0xf]
    %v770 = vld [vmem:[#allocation5 + $0x4c] sm:$0xf]
    %v771 = vld [vmem:[#allocation5 + $0x58] sm:$0xf]
    %v772 = vld [vmem:[#allocation5 + $0x64] sm:$0xf]
    %v773 = vld [vmem:[#allocation5 + $0x70] sm:$0xf]
    %v774 = vld [vmem:[#allocation5 + $0x7c] sm:$0xf]
    %v775 = vld [vmem:[#allocation5 + $0x88] sm:$0xf]
    %v776 = vld [vmem:[#allocation5 + $0x94] sm:$0xf]
    %v777 = vld [vmem:[#allocation5 + $0xa0] sm:$0xf]
    %v778 = vld [vmem:[#allocation5 + $0xac] sm:$0xf]
    %v779 = vld [vmem:[#allocation5 + $0xb8] sm:$0xf]
    %v780 = vld [vmem:[#allocation5 + $0xc4] sm:$0xf]
    %v781 = vld [vmem:[#allocation5 + $0xd0] sm:$0xf]
    %v782 = vld [vmem:[#allocation5 + $0xdc] sm:$0xf]
    %v783 = vld [vmem:[#allocation5 + $0xe8] sm:$0xf]
    %v784 = vld [vmem:[#allocation5 + $0xf4] sm:$0xf]
    %v785 = vld [vmem:[#allocation5 + $0x100] sm:$0xf]
    %v786 = vld [vmem:[#allocation5 + $0x10c] sm:$0xf]
    %v787 = vld [vmem:[#allocation5 + $0x118] sm:$0xf]
    %v788 = vld [vmem:[#allocation5 + $0x124] sm:$0xf]
    %v789 = vld [vmem:[#allocation5 + $0x130] sm:$0xf]
    %v790 = vld [vmem:[#allocation5 + $0x13c] sm:$0xf]
    %v791 = vld [vmem:[#allocation5 + $0x148] sm:$0xf]
    %v792 = vld [vmem:[#allocation5 + $0x154] sm:$0xf]
    %v793 = vld [vmem:[#allocation5 + $0x160] sm:$0xf]
    %v794 = vld [vmem:[#allocation5 + $0x16c] sm:$0xf]
    %v795 = vld [vmem:[#allocation5 + $0x178] sm:$0xf]
    %v796 = vld [vmem:[#allocation5 + $0x184] sm:$0xf]
    %v797 = vld [vmem:[#allocation5 + $0x190] sm:$0xf]
    %v798 = vld [vmem:[#allocation5 + $0x19c] sm:$0xf]
    %v799 = vld [vmem:[#allocation5 + $0x1a8] sm:$0xf]
    %v800 = vld [vmem:[#allocation5 + $0x1b4] sm:$0xf]
    %v801 = vld [vmem:[#allocation5 + $0x1c0] sm:$0xf]
    %v802 = vld [vmem:[#allocation5 + $0x1cc] sm:$0xf]
    %v803 = vld [vmem:[#allocation5 + $0x1d8] sm:$0xf]
    %v804 = vld [vmem:[#allocation5 + $0x1e4] sm:$0xf]
    %v805 = vld [vmem:[#allocation5 + $0x1f0] sm:$0xf]
    %v806 = vld [vmem:[#allocation5 + $0x1fc] sm:$0xf]
    %v807 = vld [vmem:[#allocation5 + $0x208] sm:$0xf]
    %v808 = vld [vmem:[#allocation5 + $0x214] sm:$0xf]
    %v809 = vld [vmem:[#allocation5 + $0x220] sm:$0xf]
    %v810 = vld [vmem:[#allocation5 + $0x22c] sm:$0xf]
    %v811 = vld [vmem:[#allocation5 + $0x238] sm:$0xf]
    %v812 = vld [vmem:[#allocation5 + $0x244] sm:$0xf]
    %v813 = vld [vmem:[#allocation5 + $0x250] sm:$0xf]
    %v814 = vld [vmem:[#allocation5 + $0x25c] sm:$0xf]
    %v815 = vld [vmem:[#allocation5 + $0x268] sm:$0xf]
    %v816 = vld [vmem:[#allocation5 + $0x274] sm:$0xf]
    %v817 = vld [vmem:[#allocation5 + $0x280] sm:$0xf]
    %v818 = vld [vmem:[#allocation5 + $0x28c] sm:$0xf]
    %v819 = vld [vmem:[#allocation5 + $0x298] sm:$0xf]
    %v820 = vld [vmem:[#allocation5 + $0x2a4] sm:$0xf]
    %v821 = vld [vmem:[#allocation5 + $0x2b0] sm:$0xf]
    %v822 = vld [vmem:[#allocation5 + $0x2bc] sm:$0xf]
    %v823 = vld [vmem:[#allocation5 + $0x2c8] sm:$0xf]
    %v824 = vld [vmem:[#allocation5 + $0x2d4] sm:$0xf]
    %v825 = vld [vmem:[#allocation5 + $0x2e0] sm:$0xf]
    %v826 = vld [vmem:[#allocation5 + $0x2ec] sm:$0xf]
    %v827 = vld [vmem:[#allocation5 + $0x2f8] sm:$0xf]
    %v828 = vld [vmem:[#allocation5 + $0x304] sm:$0xf]
    %v829 = vld [vmem:[#allocation5 + $0x310] sm:$0xf]
    %v830 = vld [vmem:[#allocation5 + $0x31c] sm:$0xf]
    %v831 = vld [vmem:[#allocation5 + $0x328] sm:$0xf]
    %v832 = vld [vmem:[#allocation5 + $0x334] sm:$0xf]
    %v833 = vld [vmem:[#allocation5 + $0x340] sm:$0xf]
    %v834 = vld [vmem:[#allocation5 + $0x34c] sm:$0xf]
    %v835 = vld [vmem:[#allocation5 + $0x358] sm:$0xf]
    %v836 = vld [vmem:[#allocation5 + $0x364] sm:$0xf]
    %v837 = vld [vmem:[#allocation5 + $0x370] sm:$0xf]
    %v838 = vld [vmem:[#allocation5 + $0x37c] sm:$0xf]
    %v839 = vld [vmem:[#allocation5 + $0x388] sm:$0xf]
    %v840 = vld [vmem:[#allocation5 + $0x394] sm:$0xf]
    %v841 = vld [vmem:[#allocation5 + $0x3a0] sm:$0xf]
    %v842 = vld [vmem:[#allocation5 + $0x3ac] sm:$0xf]
    %v843 = vld [vmem:[#allocation5 + $0x3b8] sm:$0xf]
    %v844 = vld [vmem:[#allocation5 + $0x3c4] sm:$0xf]
    %v845 = vld [vmem:[#allocation5 + $0x3d0] sm:$0xf]
    %v846 = vld [vmem:[#allocation5 + $0x3dc] sm:$0xf]
    %v847 = vld [vmem:[#allocation5 + $0x3e8] sm:$0xf]
    %v848 = vld [vmem:[#allocation5 + $0x3f4] sm:$0xf]
    %v849 = vld [vmem:[#allocation5 + $0x400] sm:$0xf]
    %v850 = vld [vmem:[#allocation5 + $0x40c] sm:$0xf]
    %v851 = vld [vmem:[#allocation5 + $0x418] sm:$0xf]
    %v852 = vld [vmem:[#allocation5 + $0x424] sm:$0xf]
    %v853 = vld [vmem:[#allocation5 + $0x430] sm:$0xf]
    %v854 = vld [vmem:[#allocation5 + $0x43c] sm:$0xf]
    %v855 = vld [vmem:[#allocation5 + $0x448] sm:$0xf]
    %v856 = vld [vmem:[#allocation5 + $0x454] sm:$0xf]
    %v857 = vld [vmem:[#allocation5 + $0x460] sm:$0xf]
    %v858 = vld [vmem:[#allocation5 + $0x46c] sm:$0xf]
    %v859 = vld [vmem:[#allocation5 + $0x478] sm:$0xf]
    %v860 = vld [vmem:[#allocation5 + $0x484] sm:$0xf]
    %v861 = vld [vmem:[#allocation5 + $0x490] sm:$0xf]
    %v862 = vld [vmem:[#allocation5 + $0x49c] sm:$0xf]
    %v863 = vld [vmem:[#allocation5 + $0x4a8] sm:$0xf]
    %v864 = vld [vmem:[#allocation5 + $0x4b4] sm:$0xf]
    %v865 = vld [vmem:[#allocation5 + $0x4c0] sm:$0xf]
    %v866 = vld [vmem:[#allocation5 + $0x4cc] sm:$0xf]
    %v867 = vld [vmem:[#allocation5 + $0x4d8] sm:$0xf]
    %v868 = vld [vmem:[#allocation5 + $0x4e4] sm:$0xf]
    %v869 = vld [vmem:[#allocation5 + $0x4f0] sm:$0xf]
    %v870 = vld [vmem:[#allocation5 + $0x4fc] sm:$0xf]
    %v871 = vld [vmem:[#allocation5 + $0x508] sm:$0xf]
    %v872 = vld [vmem:[#allocation5 + $0x514] sm:$0xf]
    %v873 = vld [vmem:[#allocation5 + $0x520] sm:$0xf]
    %v874 = vld [vmem:[#allocation5 + $0x52c] sm:$0xf]
    %v875 = vld [vmem:[#allocation5 + $0x538] sm:$0xf]
    %v876 = vld [vmem:[#allocation5 + $0x544] sm:$0xf]
    %v877 = vld [vmem:[#allocation5 + $0x550] sm:$0xf]
    %v878 = vld [vmem:[#allocation5 + $0x55c] sm:$0xf]
    %v879 = vld [vmem:[#allocation5 + $0x568] sm:$0xf]
    %v880 = vld [vmem:[#allocation5 + $0x574] sm:$0xf]
    %v881 = vld [vmem:[#allocation5 + $0x580] sm:$0xf]
    %v882 = vld [vmem:[#allocation5 + $0x58c] sm:$0xf]
    %v883 = vld [vmem:[#allocation5 + $0x598] sm:$0xf]
    %v884 = vld [vmem:[#allocation5 + $0x5a4] sm:$0xf]
    %v885 = vld [vmem:[#allocation5 + $0x5b0] sm:$0xf]
    %v886 = vld [vmem:[#allocation5 + $0x5bc] sm:$0xf]
    %v887 = vld [vmem:[#allocation5 + $0x5c8] sm:$0xf]
    %v888 = vld [vmem:[#allocation5 + $0x5d4] sm:$0xf]
    %v889 = vld [vmem:[#allocation5 + $0x5e0] sm:$0xf]
    %v890 = vld [vmem:[#allocation5 + $0x5ec] sm:$0xf]
    %v891 = vld [vmem:[#allocation5 + $0x5f8] sm:$0xf]
    %v892 = vld [vmem:[#allocation7 + $0x1] sm:$0x1]
    %v894 = vperm.slane %v892, 0
    %v904 = vunpack.c.l.b16 %v756
    %v905 = vunpack.c.h.b16 %v756
    %v906 = vunpack.c.l.b16 %v757
    %v907 = vunpack.c.h.b16 %v757
    %v908 = vunpack.c.l.b16 %v758
    %v909 = vunpack.c.h.b16 %v758
    %v910 = vunpack.c.l.b16 %v759
    %v911 = vunpack.c.h.b16 %v759
    %v912 = vunpack.c.l.b16 %v760
    %v913 = vunpack.c.h.b16 %v760
    %v914 = vunpack.c.l.b16 %v761
    %v915 = vunpack.c.h.b16 %v761
    %v916 = vunpack.c.l.b16 %v762
    %v917 = vunpack.c.h.b16 %v762
    %v918 = vunpack.c.l.b16 %v763
    %v919 = vunpack.c.h.b16 %v763
    %v920 = vpack.c.b16 %v912, %v904
    %v921 = vpack.c.b16 %v913, %v905
    %v922 = vpack.c.b16 %v914, %v906
    %v923 = vpack.c.b16 %v915, %v907
    %v924 = vpack.c.b16 %v916, %v908
    %v925 = vpack.c.b16 %v917, %v909
    %v926 = vpack.c.b16 %v918, %v910
    %v927 = vpack.c.b16 %v919, %v911
    %v1064 = vunpack.c.l.b16 %v764
    %v1065 = vunpack.c.l.b16 %v765
    %v1066 = vunpack.c.l.b16 %v766
    %v1067 = vunpack.c.l.b16 %v767
    %v1068 = vunpack.c.l.b16 %v768
    %v1069 = vunpack.c.l.b16 %v769
    %v1070 = vunpack.c.l.b16 %v770
    %v1071 = vunpack.c.l.b16 %v771
    %v1072 = vunpack.c.l.b16 %v772
    %v1073 = vunpack.c.l.b16 %v773
    %v1074 = vunpack.c.l.b16 %v774
    %v1075 = vunpack.c.l.b16 %v775
    %v1076 = vunpack.c.l.b16 %v776
    %v1077 = vunpack.c.l.b16 %v777
    %v1078 = vunpack.c.l.b16 %v778
    %v1079 = vunpack.c.l.b16 %v779
    %v1080 = vunpack.c.l.b16 %v780
    %v1081 = vunpack.c.l.b16 %v781
    %v1082 = vunpack.c.l.b16 %v782
    %v1083 = vunpack.c.l.b16 %v783
    %v1084 = vunpack.c.l.b16 %v784
    %v1085 = vunpack.c.l.b16 %v785
    %v1086 = vunpack.c.l.b16 %v786
    %v1087 = vunpack.c.l.b16 %v787
    %v1088 = vunpack.c.l.b16 %v788
    %v1089 = vunpack.c.l.b16 %v789
    %v1090 = vunpack.c.l.b16 %v790
    %v1091 = vunpack.c.l.b16 %v791
    %v1092 = vunpack.c.l.b16 %v792
    %v1093 = vunpack.c.l.b16 %v793
    %v1094 = vunpack.c.l.b16 %v794
    %v1095 = vunpack.c.l.b16 %v795
    %v1096 = vunpack.c.l.b16 %v796
    %v1097 = vunpack.c.l.b16 %v797
    %v1098 = vunpack.c.l.b16 %v798
    %v1099 = vunpack.c.l.b16 %v799
    %v1100 = vunpack.c.l.b16 %v800
    %v1101 = vunpack.c.l.b16 %v801
    %v1102 = vunpack.c.l.b16 %v802
    %v1103 = vunpack.c.l.b16 %v803
    %v1104 = vunpack.c.l.b16 %v804
    %v1105 = vunpack.c.l.b16 %v805
    %v1106 = vunpack.c.l.b16 %v806
    %v1107 = vunpack.c.l.b16 %v807
    %v1108 = vunpack.c.l.b16 %v808
    %v1109 = vunpack.c.l.b16 %v809
    %v1110 = vunpack.c.l.b16 %v810
    %v1111 = vunpack.c.l.b16 %v811
    %v1112 = vunpack.c.l.b16 %v812
    %v1113 = vunpack.c.l.b16 %v813
    %v1114 = vunpack.c.l.b16 %v814
    %v1115 = vunpack.c.l.b16 %v815
    %v1116 = vunpack.c.l.b16 %v816
    %v1117 = vunpack.c.l.b16 %v817
    %v1118 = vunpack.c.l.b16 %v818
    %v1119 = vunpack.c.l.b16 %v819
    %v1120 = vunpack.c.l.b16 %v820
    %v1121 = vunpack.c.l.b16 %v821
    %v1122 = vunpack.c.l.b16 %v822
    %v1123 = vunpack.c.l.b16 %v823
    %v1124 = vunpack.c.l.b16 %v824
    %v1125 = vunpack.c.l.b16 %v825
    %v1126 = vunpack.c.l.b16 %v826
    %v1127 = vunpack.c.l.b16 %v827
    %v1128 = vunpack.c.l.b16 %v828
    %v1129 = vunpack.c.l.b16 %v829
    %v1130 = vunpack.c.l.b16 %v830
    %v1131 = vunpack.c.l.b16 %v831
    %v1132 = vunpack.c.l.b16 %v832
    %v1133 = vunpack.c.l.b16 %v833
    %v1134 = vunpack.c.l.b16 %v834
    %v1135 = vunpack.c.l.b16 %v835
    %v1136 = vunpack.c.l.b16 %v836
    %v1137 = vunpack.c.l.b16 %v837
    %v1138 = vunpack.c.l.b16 %v838
    %v1139 = vunpack.c.l.b16 %v839
    %v1140 = vunpack.c.l.b16 %v840
    %v1141 = vunpack.c.l.b16 %v841
    %v1142 = vunpack.c.l.b16 %v842
    %v1143 = vunpack.c.l.b16 %v843
    %v1144 = vunpack.c.l.b16 %v844
    %v1145 = vunpack.c.l.b16 %v845
    %v1146 = vunpack.c.l.b16 %v846
    %v1147 = vunpack.c.l.b16 %v847
    %v1148 = vunpack.c.l.b16 %v848
    %v1149 = vunpack.c.l.b16 %v849
    %v1150 = vunpack.c.l.b16 %v850
    %v1151 = vunpack.c.l.b16 %v851
    %v1152 = vunpack.c.l.b16 %v852
    %v1153 = vunpack.c.l.b16 %v853
    %v1154 = vunpack.c.l.b16 %v854
    %v1155 = vunpack.c.l.b16 %v855
    %v1156 = vunpack.c.l.b16 %v856
    %v1157 = vunpack.c.l.b16 %v857
    %v1158 = vunpack.c.l.b16 %v858
    %v1159 = vunpack.c.l.b16 %v859
    %v1160 = vunpack.c.l.b16 %v860
    %v1161 = vunpack.c.l.b16 %v861
    %v1162 = vunpack.c.l.b16 %v862
    %v1163 = vunpack.c.l.b16 %v863
    %v1164 = vunpack.c.l.b16 %v864
    %v1165 = vunpack.c.l.b16 %v865
    %v1166 = vunpack.c.l.b16 %v866
    %v1167 = vunpack.c.l.b16 %v867
    %v1168 = vunpack.c.l.b16 %v868
    %v1169 = vunpack.c.l.b16 %v869
    %v1170 = vunpack.c.l.b16 %v870
    %v1171 = vunpack.c.l.b16 %v871
    %v1172 = vunpack.c.l.b16 %v872
    %v1173 = vunpack.c.l.b16 %v873
    %v1174 = vunpack.c.l.b16 %v874
    %v1175 = vunpack.c.l.b16 %v875
    %v1176 = vunpack.c.l.b16 %v876
    %v1177 = vunpack.c.l.b16 %v877
    %v1178 = vunpack.c.l.b16 %v878
    %v1179 = vunpack.c.l.b16 %v879
    %v1180 = vunpack.c.l.b16 %v880
    %v1181 = vunpack.c.l.b16 %v881
    %v1182 = vunpack.c.l.b16 %v882
    %v1183 = vunpack.c.l.b16 %v883
    %v1184 = vunpack.c.l.b16 %v884
    %v1185 = vunpack.c.l.b16 %v885
    %v1186 = vunpack.c.l.b16 %v886
    %v1187 = vunpack.c.l.b16 %v887
    %v1188 = vunpack.c.l.b16 %v888
    %v1189 = vunpack.c.l.b16 %v889
    %v1190 = vunpack.c.l.b16 %v890
    %v1191 = vunpack.c.l.b16 %v891
    %v1192 = vpack.c.b16 %v1065, %v1064
    %v1193 = vpack.c.b16 %v1067, %v1066
    %v1194 = vpack.c.b16 %v1069, %v1068
    %v1195 = vpack.c.b16 %v1071, %v1070
    %v1196 = vpack.c.b16 %v1073, %v1072
    %v1197 = vpack.c.b16 %v1075, %v1074
    %v1198 = vpack.c.b16 %v1077, %v1076
    %v1199 = vpack.c.b16 %v1079, %v1078
    %v1200 = vpack.c.b16 %v1081, %v1080
    %v1201 = vpack.c.b16 %v1083, %v1082
    %v1202 = vpack.c.b16 %v1085, %v1084
    %v1203 = vpack.c.b16 %v1087, %v1086
    %v1204 = vpack.c.b16 %v1089, %v1088
    %v1205 = vpack.c.b16 %v1091, %v1090
    %v1206 = vpack.c.b16 %v1093, %v1092
    %v1207 = vpack.c.b16 %v1095, %v1094
    %v1208 = vpack.c.b16 %v1097, %v1096
    %v1209 = vpack.c.b16 %v1099, %v1098
    %v1210 = vpack.c.b16 %v1101, %v1100
    %v1211 = vpack.c.b16 %v1103, %v1102
    %v1212 = vpack.c.b16 %v1105, %v1104
    %v1213 = vpack.c.b16 %v1107, %v1106
    %v1214 = vpack.c.b16 %v1109, %v1108
    %v1215 = vpack.c.b16 %v1111, %v1110
    %v1216 = vpack.c.b16 %v1113, %v1112
    %v1217 = vpack.c.b16 %v1115, %v1114
    %v1218 = vpack.c.b16 %v1117, %v1116
    %v1219 = vpack.c.b16 %v1119, %v1118
    %v1220 = vpack.c.b16 %v1121, %v1120
    %v1221 = vpack.c.b16 %v1123, %v1122
    %v1222 = vpack.c.b16 %v1125, %v1124
    %v1223 = vpack.c.b16 %v1127, %v1126
    %v1224 = vpack.c.b16 %v1129, %v1128
    %v1225 = vpack.c.b16 %v1131, %v1130
    %v1226 = vpack.c.b16 %v1133, %v1132
    %v1227 = vpack.c.b16 %v1135, %v1134
    %v1228 = vpack.c.b16 %v1137, %v1136
    %v1229 = vpack.c.b16 %v1139, %v1138
    %v1230 = vpack.c.b16 %v1141, %v1140
    %v1231 = vpack.c.b16 %v1143, %v1142
    %v1232 = vpack.c.b16 %v1145, %v1144
    %v1233 = vpack.c.b16 %v1147, %v1146
    %v1234 = vpack.c.b16 %v1149, %v1148
    %v1235 = vpack.c.b16 %v1151, %v1150
    %v1236 = vpack.c.b16 %v1153, %v1152
    %v1237 = vpack.c.b16 %v1155, %v1154
    %v1238 = vpack.c.b16 %v1157, %v1156
    %v1239 = vpack.c.b16 %v1159, %v1158
    %v1240 = vpack.c.b16 %v1161, %v1160
    %v1241 = vpack.c.b16 %v1163, %v1162
    %v1242 = vpack.c.b16 %v1165, %v1164
    %v1243 = vpack.c.b16 %v1167, %v1166
    %v1244 = vpack.c.b16 %v1169, %v1168
    %v1245 = vpack.c.b16 %v1171, %v1170
    %v1246 = vpack.c.b16 %v1173, %v1172
    %v1247 = vpack.c.b16 %v1175, %v1174
    %v1248 = vpack.c.b16 %v1177, %v1176
    %v1249 = vpack.c.b16 %v1179, %v1178
    %v1250 = vpack.c.b16 %v1181, %v1180
    %v1251 = vpack.c.b16 %v1183, %v1182
    %v1252 = vpack.c.b16 %v1185, %v1184
    %v1253 = vpack.c.b16 %v1187, %v1186
    %v1254 = vpack.c.b16 %v1189, %v1188
    %v1255 = vpack.c.b16 %v1191, %v1190
    %1320 = vmatpush.bf16.msra.mxu0 %v1199
    %1321 = vmatpush.bf16.msra.mxu0 %v1198
    %1322 = vmatpush.bf16.msra.mxu0 %v1197
    %1323 = vmatpush.bf16.msra.mxu0 %v1196
    %1324 = vmatpush.bf16.msra.mxu0 %v1195
    %1325 = vmatpush.bf16.msra.mxu0 %v1194
    %1326 = vmatpush.bf16.msra.mxu0 %v1193
    %1327 = vmatpush.bf16.msra.mxu0 %v1192
    %1328 = vmatmul.bf16.gmra.mxu0 %v920
    %v1329 = vpop.f32.mrf.mxu0
    %v1330 = vadd.f32 %v894, %v1329
    %v1331 = vpop.f32.mrf.mxu0
    %v1332 = vadd.f32 %v894, %v1331
    %1333 = vdwg.mxu0
    %1334 = vmatpush.bf16.msra.mxu0 %v1207
    %1335 = vmatpush.bf16.msra.mxu0 %v1206
    %1336 = vmatpush.bf16.msra.mxu0 %v1205
    %1337 = vmatpush.bf16.msra.mxu0 %v1204
    %1338 = vmatpush.bf16.msra.mxu0 %v1203
    %1339 = vmatpush.bf16.msra.mxu0 %v1202
    %1340 = vmatpush.bf16.msra.mxu0 %v1201
    %1341 = vmatpush.bf16.msra.mxu0 %v1200
    %1342 = vmatmul.bf16.gmra.mxu0 %v921
    %v1343 = vpop.f32.mrf.mxu0
    %v1344 = vadd.f32 %v1330, %v1343
    %v1345 = vpop.f32.mrf.mxu0
    %v1346 = vadd.f32 %v1332, %v1345
    %1347 = vdwg.mxu0
    %1348 = vmatpush.bf16.msra.mxu0 %v1215
    %1349 = vmatpush.bf16.msra.mxu0 %v1214
    %1350 = vmatpush.bf16.msra.mxu0 %v1213
    %1351 = vmatpush.bf16.msra.mxu0 %v1212
    %1352 = vmatpush.bf16.msra.mxu0 %v1211
    %1353 = vmatpush.bf16.msra.mxu0 %v1210
    %1354 = vmatpush.bf16.msra.mxu0 %v1209
    %1355 = vmatpush.bf16.msra.mxu0 %v1208
    %1356 = vmatmul.bf16.gmra.mxu0 %v922
    %v1357 = vpop.f32.mrf.mxu0
    %v1358 = vadd.f32 %v1344, %v1357
    %v1359 = vpop.f32.mrf.mxu0
    %v1360 = vadd.f32 %v1346, %v1359
    %1361 = vdwg.mxu0
    %1362 = vmatpush.bf16.msra.mxu0 %v1223
    %1363 = vmatpush.bf16.msra.mxu0 %v1222
    %1364 = vmatpush.bf16.msra.mxu0 %v1221
    %1365 = vmatpush.bf16.msra.mxu0 %v1220
    %1366 = vmatpush.bf16.msra.mxu0 %v1219
    %1367 = vmatpush.bf16.msra.mxu0 %v1218
    %1368 = vmatpush.bf16.msra.mxu0 %v1217
    %1369 = vmatpush.bf16.msra.mxu0 %v1216
    %1370 = vmatmul.bf16.gmra.mxu0 %v923
    %v1371 = vpop.f32.mrf.mxu0
    %v1372 = vadd.f32 %v1358, %v1371
    %v1373 = vpop.f32.mrf.mxu0
    %v1374 = vadd.f32 %v1360, %v1373
    %1375 = vdwg.mxu0
    %1376 = vmatpush.bf16.msra.mxu0 %v1231
    %1377 = vmatpush.bf16.msra.mxu0 %v1230
    %1378 = vmatpush.bf16.msra.mxu0 %v1229
    %1379 = vmatpush.bf16.msra.mxu0 %v1228
    %1380 = vmatpush.bf16.msra.mxu0 %v1227
    %1381 = vmatpush.bf16.msra.mxu0 %v1226
    %1382 = vmatpush.bf16.msra.mxu0 %v1225
    %1383 = vmatpush.bf16.msra.mxu0 %v1224
    %1384 = vmatmul.bf16.gmra.mxu0 %v924
    %v1385 = vpop.f32.mrf.mxu0
    %v1386 = vadd.f32 %v1372, %v1385
    %v1387 = vpop.f32.mrf.mxu0
    %v1388 = vadd.f32 %v1374, %v1387
    %1389 = vdwg.mxu0
    %1390 = vmatpush.bf16.msra.mxu0 %v1239
    %1391 = vmatpush.bf16.msra.mxu0 %v1238
    %1392 = vmatpush.bf16.msra.mxu0 %v1237
    %1393 = vmatpush.bf16.msra.mxu0 %v1236
    %1394 = vmatpush.bf16.msra.mxu0 %v1235
    %1395 = vmatpush.bf16.msra.mxu0 %v1234
    %1396 = vmatpush.bf16.msra.mxu0 %v1233
    %1397 = vmatpush.bf16.msra.mxu0 %v1232
    %1398 = vmatmul.bf16.gmra.mxu0 %v925
    %v1399 = vpop.f32.mrf.mxu0
    %v1400 = vadd.f32 %v1386, %v1399
    %v1401 = vpop.f32.mrf.mxu0
    %v1402 = vadd.f32 %v1388, %v1401
    %1403 = vdwg.mxu0
    %1404 = vmatpush.bf16.msra.mxu0 %v1247
    %1405 = vmatpush.bf16.msra.mxu0 %v1246
    %1406 = vmatpush.bf16.msra.mxu0 %v1245
    %1407 = vmatpush.bf16.msra.mxu0 %v1244
    %1408 = vmatpush.bf16.msra.mxu0 %v1243
    %1409 = vmatpush.bf16.msra.mxu0 %v1242
    %1410 = vmatpush.bf16.msra.mxu0 %v1241
    %1411 = vmatpush.bf16.msra.mxu0 %v1240
    %1412 = vmatmul.bf16.gmra.mxu0 %v926
    %v1413 = vpop.f32.mrf.mxu0
    %v1414 = vadd.f32 %v1400, %v1413
    %v1415 = vpop.f32.mrf.mxu0
    %v1416 = vadd.f32 %v1402, %v1415
    %1417 = vdwg.mxu0
    %1418 = vmatpush.bf16.msra.mxu0 %v1255
    %1419 = vmatpush.bf16.msra.mxu0 %v1254
    %1420 = vmatpush.bf16.msra.mxu0 %v1253
    %1421 = vmatpush.bf16.msra.mxu0 %v1252
    %1422 = vmatpush.bf16.msra.mxu0 %v1251
    %1423 = vmatpush.bf16.msra.mxu0 %v1250
    %1424 = vmatpush.bf16.msra.mxu0 %v1249
    %1425 = vmatpush.bf16.msra.mxu0 %v1248
    %1426 = vmatmul.bf16.gmra.mxu0 %v927
    %v1427 = vpop.f32.mrf.mxu0
    %v1428 = vadd.f32 %v1414, %v1427
    %v1429 = vpop.f32.mrf.mxu0
    %v1430 = vadd.f32 %v1416, %v1429
    %1431 = vdwg.mxu0
    %1432 = vmax.xlane.f32.xlu0 %v1428
    %v1433 = vpop.xlane.xlu0 %1432
    %1434 = vmax.xlane.f32.xlu0 %v1430
    %v1435 = vpop.xlane.xlu0 %1434
    %v1436 = vsub.f32 %v1428, %v1433
    %v1437 = vsub.f32 %v1430, %v1435
    %v1438 = vmul.f32 %v1436, 1.442695
    %v1439 = vpow.pop %v1438
    %v1440 = vmul.f32 %v1437, 1.442695
    %v1441 = vpow.pop %v1440
    %1442 = vadd.xlane.f32.xlu0 %v1439
    %v1443 = vpop.xlane.xlu0 %1442
    %1444 = vadd.xlane.f32.xlu0 %v1441
    %v1445 = vpop.xlane.xlu0 %1444
    %v1446 = vrcp.pop %v1443
    %v1447 = vrcp.pop %v1445
    %v1448 = vmul.f32 %v1439, %v1446
    %v1449 = vmul.f32 %v1441, %v1447
    %v1450 = vld [vmem:[#allocation8] sm:$0xff]
    %v1451 = vld [vmem:[#allocation8 + $0x8] sm:$0xff]
    %v1452 = vadd.f32 %v1450, %v1448
    %v1453 = vadd.f32 %v1451, %v1449
    %1454 = vst [vmem:[#allocation8] sm:$0xff] %v1452
    %1455 = vst [vmem:[#allocation8 + $0x8] sm:$0xff] %v1453
    %v1456 = vld [vmem:[#allocation2] sm:$0xff]
    %v1457 = vld [vmem:[#allocation2 + $0x8] sm:$0xff]
    %v1458 = vld [vmem:[#allocation2 + $0x10] sm:$0xff]
    %v1459 = vld [vmem:[#allocation2 + $0x18] sm:$0xff]
    %v1460 = vld [vmem:[#allocation2 + $0x20] sm:$0xff]
    %v1461 = vld [vmem:[#allocation2 + $0x28] sm:$0xff]
    %v1462 = vld [vmem:[#allocation2 + $0x30] sm:$0xff]
    %v1463 = vld [vmem:[#allocation2 + $0x38] sm:$0xff]
    %v1464 = vld [vmem:[#allocation5 + $0x8] sm:$0xf]
    %v1465 = vld [vmem:[#allocation5 + $0x14] sm:$0xf]
    %v1466 = vld [vmem:[#allocation5 + $0x20] sm:$0xf]
    %v1467 = vld [vmem:[#allocation5 + $0x2c] sm:$0xf]
    %v1468 = vld [vmem:[#allocation5 + $0x38] sm:$0xf]
    %v1469 = vld [vmem:[#allocation5 + $0x44] sm:$0xf]
    %v1470 = vld [vmem:[#allocation5 + $0x50] sm:$0xf]
    %v1471 = vld [vmem:[#allocation5 + $0x5c] sm:$0xf]
    %v1472 = vld [vmem:[#allocation5 + $0x68] sm:$0xf]
    %v1473 = vld [vmem:[#allocation5 + $0x74] sm:$0xf]
    %v1474 = vld [vmem:[#allocation5 + $0x80] sm:$0xf]
    %v1475 = vld [vmem:[#allocation5 + $0x8c] sm:$0xf]
    %v1476 = vld [vmem:[#allocation5 + $0x98] sm:$0xf]
    %v1477 = vld [vmem:[#allocation5 + $0xa4] sm:$0xf]
    %v1478 = vld [vmem:[#allocation5 + $0xb0] sm:$0xf]
    %v1479 = vld [vmem:[#allocation5 + $0xbc] sm:$0xf]
    %v1480 = vld [vmem:[#allocation5 + $0xc8] sm:$0xf]
    %v1481 = vld [vmem:[#allocation5 + $0xd4] sm:$0xf]
    %v1482 = vld [vmem:[#allocation5 + $0xe0] sm:$0xf]
    %v1483 = vld [vmem:[#allocation5 + $0xec] sm:$0xf]
    %v1484 = vld [vmem:[#allocation5 + $0xf8] sm:$0xf]
    %v1485 = vld [vmem:[#allocation5 + $0x104] sm:$0xf]
    %v1486 = vld [vmem:[#allocation5 + $0x110] sm:$0xf]
    %v1487 = vld [vmem:[#allocation5 + $0x11c] sm:$0xf]
    %v1488 = vld [vmem:[#allocation5 + $0x128] sm:$0xf]
    %v1489 = vld [vmem:[#allocation5 + $0x134] sm:$0xf]
    %v1490 = vld [vmem:[#allocation5 + $0x140] sm:$0xf]
    %v1491 = vld [vmem:[#allocation5 + $0x14c] sm:$0xf]
    %v1492 = vld [vmem:[#allocation5 + $0x158] sm:$0xf]
    %v1493 = vld [vmem:[#allocation5 + $0x164] sm:$0xf]
    %v1494 = vld [vmem:[#allocation5 + $0x170] sm:$0xf]
    %v1495 = vld [vmem:[#allocation5 + $0x17c] sm:$0xf]
    %v1496 = vld [vmem:[#allocation5 + $0x188] sm:$0xf]
    %v1497 = vld [vmem:[#allocation5 + $0x194] sm:$0xf]
    %v1498 = vld [vmem:[#allocation5 + $0x1a0] sm:$0xf]
    %v1499 = vld [vmem:[#allocation5 + $0x1ac] sm:$0xf]
    %v1500 = vld [vmem:[#allocation5 + $0x1b8] sm:$0xf]
    %v1501 = vld [vmem:[#allocation5 + $0x1c4] sm:$0xf]
    %v1502 = vld [vmem:[#allocation5 + $0x1d0] sm:$0xf]
    %v1503 = vld [vmem:[#allocation5 + $0x1dc] sm:$0xf]
    %v1504 = vld [vmem:[#allocation5 + $0x1e8] sm:$0xf]
    %v1505 = vld [vmem:[#allocation5 + $0x1f4] sm:$0xf]
    %v1506 = vld [vmem:[#allocation5 + $0x200] sm:$0xf]
    %v1507 = vld [vmem:[#allocation5 + $0x20c] sm:$0xf]
    %v1508 = vld [vmem:[#allocation5 + $0x218] sm:$0xf]
    %v1509 = vld [vmem:[#allocation5 + $0x224] sm:$0xf]
    %v1510 = vld [vmem:[#allocation5 + $0x230] sm:$0xf]
    %v1511 = vld [vmem:[#allocation5 + $0x23c] sm:$0xf]
    %v1512 = vld [vmem:[#allocation5 + $0x248] sm:$0xf]
    %v1513 = vld [vmem:[#allocation5 + $0x254] sm:$0xf]
    %v1514 = vld [vmem:[#allocation5 + $0x260] sm:$0xf]
    %v1515 = vld [vmem:[#allocation5 + $0x26c] sm:$0xf]
    %v1516 = vld [vmem:[#allocation5 + $0x278] sm:$0xf]
    %v1517 = vld [vmem:[#allocation5 + $0x284] sm:$0xf]
    %v1518 = vld [vmem:[#allocation5 + $0x290] sm:$0xf]
    %v1519 = vld [vmem:[#allocation5 + $0x29c] sm:$0xf]
    %v1520 = vld [vmem:[#allocation5 + $0x2a8] sm:$0xf]
    %v1521 = vld [vmem:[#allocation5 + $0x2b4] sm:$0xf]
    %v1522 = vld [vmem:[#allocation5 + $0x2c0] sm:$0xf]
    %v1523 = vld [vmem:[#allocation5 + $0x2cc] sm:$0xf]
    %v1524 = vld [vmem:[#allocation5 + $0x2d8] sm:$0xf]
    %v1525 = vld [vmem:[#allocation5 + $0x2e4] sm:$0xf]
    %v1526 = vld [vmem:[#allocation5 + $0x2f0] sm:$0xf]
    %v1527 = vld [vmem:[#allocation5 + $0x2fc] sm:$0xf]
    %v1528 = vld [vmem:[#allocation5 + $0x308] sm:$0xf]
    %v1529 = vld [vmem:[#allocation5 + $0x314] sm:$0xf]
    %v1530 = vld [vmem:[#allocation5 + $0x320] sm:$0xf]
    %v1531 = vld [vmem:[#allocation5 + $0x32c] sm:$0xf]
    %v1532 = vld [vmem:[#allocation5 + $0x338] sm:$0xf]
    %v1533 = vld [vmem:[#allocation5 + $0x344] sm:$0xf]
    %v1534 = vld [vmem:[#allocation5 + $0x350] sm:$0xf]
    %v1535 = vld [vmem:[#allocation5 + $0x35c] sm:$0xf]
    %v1536 = vld [vmem:[#allocation5 + $0x368] sm:$0xf]
    %v1537 = vld [vmem:[#allocation5 + $0x374] sm:$0xf]
    %v1538 = vld [vmem:[#allocation5 + $0x380] sm:$0xf]
    %v1539 = vld [vmem:[#allocation5 + $0x38c] sm:$0xf]
    %v1540 = vld [vmem:[#allocation5 + $0x398] sm:$0xf]
    %v1541 = vld [vmem:[#allocation5 + $0x3a4] sm:$0xf]
    %v1542 = vld [vmem:[#allocation5 + $0x3b0] sm:$0xf]
    %v1543 = vld [vmem:[#allocation5 + $0x3bc] sm:$0xf]
    %v1544 = vld [vmem:[#allocation5 + $0x3c8] sm:$0xf]
    %v1545 = vld [vmem:[#allocation5 + $0x3d4] sm:$0xf]
    %v1546 = vld [vmem:[#allocation5 + $0x3e0] sm:$0xf]
    %v1547 = vld [vmem:[#allocation5 + $0x3ec] sm:$0xf]
    %v1548 = vld [vmem:[#allocation5 + $0x3f8] sm:$0xf]
    %v1549 = vld [vmem:[#allocation5 + $0x404] sm:$0xf]
    %v1550 = vld [vmem:[#allocation5 + $0x410] sm:$0xf]
    %v1551 = vld [vmem:[#allocation5 + $0x41c] sm:$0xf]
    %v1552 = vld [vmem:[#allocation5 + $0x428] sm:$0xf]
    %v1553 = vld [vmem:[#allocation5 + $0x434] sm:$0xf]
    %v1554 = vld [vmem:[#allocation5 + $0x440] sm:$0xf]
    %v1555 = vld [vmem:[#allocation5 + $0x44c] sm:$0xf]
    %v1556 = vld [vmem:[#allocation5 + $0x458] sm:$0xf]
    %v1557 = vld [vmem:[#allocation5 + $0x464] sm:$0xf]
    %v1558 = vld [vmem:[#allocation5 + $0x470] sm:$0xf]
    %v1559 = vld [vmem:[#allocation5 + $0x47c] sm:$0xf]
    %v1560 = vld [vmem:[#allocation5 + $0x488] sm:$0xf]
    %v1561 = vld [vmem:[#allocation5 + $0x494] sm:$0xf]
    %v1562 = vld [vmem:[#allocation5 + $0x4a0] sm:$0xf]
    %v1563 = vld [vmem:[#allocation5 + $0x4ac] sm:$0xf]
    %v1564 = vld [vmem:[#allocation5 + $0x4b8] sm:$0xf]
    %v1565 = vld [vmem:[#allocation5 + $0x4c4] sm:$0xf]
    %v1566 = vld [vmem:[#allocation5 + $0x4d0] sm:$0xf]
    %v1567 = vld [vmem:[#allocation5 + $0x4dc] sm:$0xf]
    %v1568 = vld [vmem:[#allocation5 + $0x4e8] sm:$0xf]
    %v1569 = vld [vmem:[#allocation5 + $0x4f4] sm:$0xf]
    %v1570 = vld [vmem:[#allocation5 + $0x500] sm:$0xf]
    %v1571 = vld [vmem:[#allocation5 + $0x50c] sm:$0xf]
    %v1572 = vld [vmem:[#allocation5 + $0x518] sm:$0xf]
    %v1573 = vld [vmem:[#allocation5 + $0x524] sm:$0xf]
    %v1574 = vld [vmem:[#allocation5 + $0x530] sm:$0xf]
    %v1575 = vld [vmem:[#allocation5 + $0x53c] sm:$0xf]
    %v1576 = vld [vmem:[#allocation5 + $0x548] sm:$0xf]
    %v1577 = vld [vmem:[#allocation5 + $0x554] sm:$0xf]
    %v1578 = vld [vmem:[#allocation5 + $0x560] sm:$0xf]
    %v1579 = vld [vmem:[#allocation5 + $0x56c] sm:$0xf]
    %v1580 = vld [vmem:[#allocation5 + $0x578] sm:$0xf]
    %v1581 = vld [vmem:[#allocation5 + $0x584] sm:$0xf]
    %v1582 = vld [vmem:[#allocation5 + $0x590] sm:$0xf]
    %v1583 = vld [vmem:[#allocation5 + $0x59c] sm:$0xf]
    %v1584 = vld [vmem:[#allocation5 + $0x5a8] sm:$0xf]
    %v1585 = vld [vmem:[#allocation5 + $0x5b4] sm:$0xf]
    %v1586 = vld [vmem:[#allocation5 + $0x5c0] sm:$0xf]
    %v1587 = vld [vmem:[#allocation5 + $0x5cc] sm:$0xf]
    %v1588 = vld [vmem:[#allocation5 + $0x5d8] sm:$0xf]
    %v1589 = vld [vmem:[#allocation5 + $0x5e4] sm:$0xf]
    %v1590 = vld [vmem:[#allocation5 + $0x5f0] sm:$0xf]
    %v1591 = vld [vmem:[#allocation5 + $0x5fc] sm:$0xf]
    %v1592 = vld [vmem:[#allocation7 + $0x2] sm:$0x1]
    %v1594 = vperm.slane %v1592, 0
    %v1604 = vunpack.c.l.b16 %v1456
    %v1605 = vunpack.c.h.b16 %v1456
    %v1606 = vunpack.c.l.b16 %v1457
    %v1607 = vunpack.c.h.b16 %v1457
    %v1608 = vunpack.c.l.b16 %v1458
    %v1609 = vunpack.c.h.b16 %v1458
    %v1610 = vunpack.c.l.b16 %v1459
    %v1611 = vunpack.c.h.b16 %v1459
    %v1612 = vunpack.c.l.b16 %v1460
    %v1613 = vunpack.c.h.b16 %v1460
    %v1614 = vunpack.c.l.b16 %v1461
    %v1615 = vunpack.c.h.b16 %v1461
    %v1616 = vunpack.c.l.b16 %v1462
    %v1617 = vunpack.c.h.b16 %v1462
    %v1618 = vunpack.c.l.b16 %v1463
    %v1619 = vunpack.c.h.b16 %v1463
    %v1620 = vpack.c.b16 %v1612, %v1604
    %v1621 = vpack.c.b16 %v1613, %v1605
    %v1622 = vpack.c.b16 %v1614, %v1606
    %v1623 = vpack.c.b16 %v1615, %v1607
    %v1624 = vpack.c.b16 %v1616, %v1608
    %v1625 = vpack.c.b16 %v1617, %v1609
    %v1626 = vpack.c.b16 %v1618, %v1610
    %v1627 = vpack.c.b16 %v1619, %v1611
    %v1764 = vunpack.c.l.b16 %v1464
    %v1765 = vunpack.c.l.b16 %v1465
    %v1766 = vunpack.c.l.b16 %v1466
    %v1767 = vunpack.c.l.b16 %v1467
    %v1768 = vunpack.c.l.b16 %v1468
    %v1769 = vunpack.c.l.b16 %v1469
    %v1770 = vunpack.c.l.b16 %v1470
    %v1771 = vunpack.c.l.b16 %v1471
    %v1772 = vunpack.c.l.b16 %v1472
    %v1773 = vunpack.c.l.b16 %v1473
    %v1774 = vunpack.c.l.b16 %v1474
    %v1775 = vunpack.c.l.b16 %v1475
    %v1776 = vunpack.c.l.b16 %v1476
    %v1777 = vunpack.c.l.b16 %v1477
    %v1778 = vunpack.c.l.b16 %v1478
    %v1779 = vunpack.c.l.b16 %v1479
    %v1780 = vunpack.c.l.b16 %v1480
    %v1781 = vunpack.c.l.b16 %v1481
    %v1782 = vunpack.c.l.b16 %v1482
    %v1783 = vunpack.c.l.b16 %v1483
    %v1784 = vunpack.c.l.b16 %v1484
    %v1785 = vunpack.c.l.b16 %v1485
    %v1786 = vunpack.c.l.b16 %v1486
    %v1787 = vunpack.c.l.b16 %v1487
    %v1788 = vunpack.c.l.b16 %v1488
    %v1789 = vunpack.c.l.b16 %v1489
    %v1790 = vunpack.c.l.b16 %v1490
    %v1791 = vunpack.c.l.b16 %v1491
    %v1792 = vunpack.c.l.b16 %v1492
    %v1793 = vunpack.c.l.b16 %v1493
    %v1794 = vunpack.c.l.b16 %v1494
    %v1795 = vunpack.c.l.b16 %v1495
    %v1796 = vunpack.c.l.b16 %v1496
    %v1797 = vunpack.c.l.b16 %v1497
    %v1798 = vunpack.c.l.b16 %v1498
    %v1799 = vunpack.c.l.b16 %v1499
    %v1800 = vunpack.c.l.b16 %v1500
    %v1801 = vunpack.c.l.b16 %v1501
    %v1802 = vunpack.c.l.b16 %v1502
    %v1803 = vunpack.c.l.b16 %v1503
    %v1804 = vunpack.c.l.b16 %v1504
    %v1805 = vunpack.c.l.b16 %v1505
    %v1806 = vunpack.c.l.b16 %v1506
    %v1807 = vunpack.c.l.b16 %v1507
    %v1808 = vunpack.c.l.b16 %v1508
    %v1809 = vunpack.c.l.b16 %v1509
    %v1810 = vunpack.c.l.b16 %v1510
    %v1811 = vunpack.c.l.b16 %v1511
    %v1812 = vunpack.c.l.b16 %v1512
    %v1813 = vunpack.c.l.b16 %v1513
    %v1814 = vunpack.c.l.b16 %v1514
    %v1815 = vunpack.c.l.b16 %v1515
    %v1816 = vunpack.c.l.b16 %v1516
    %v1817 = vunpack.c.l.b16 %v1517
    %v1818 = vunpack.c.l.b16 %v1518
    %v1819 = vunpack.c.l.b16 %v1519
    %v1820 = vunpack.c.l.b16 %v1520
    %v1821 = vunpack.c.l.b16 %v1521
    %v1822 = vunpack.c.l.b16 %v1522
    %v1823 = vunpack.c.l.b16 %v1523
    %v1824 = vunpack.c.l.b16 %v1524
    %v1825 = vunpack.c.l.b16 %v1525
    %v1826 = vunpack.c.l.b16 %v1526
    %v1827 = vunpack.c.l.b16 %v1527
    %v1828 = vunpack.c.l.b16 %v1528
    %v1829 = vunpack.c.l.b16 %v1529
    %v1830 = vunpack.c.l.b16 %v1530
    %v1831 = vunpack.c.l.b16 %v1531
    %v1832 = vunpack.c.l.b16 %v1532
    %v1833 = vunpack.c.l.b16 %v1533
    %v1834 = vunpack.c.l.b16 %v1534
    %v1835 = vunpack.c.l.b16 %v1535
    %v1836 = vunpack.c.l.b16 %v1536
    %v1837 = vunpack.c.l.b16 %v1537
    %v1838 = vunpack.c.l.b16 %v1538
    %v1839 = vunpack.c.l.b16 %v1539
    %v1840 = vunpack.c.l.b16 %v1540
    %v1841 = vunpack.c.l.b16 %v1541
    %v1842 = vunpack.c.l.b16 %v1542
    %v1843 = vunpack.c.l.b16 %v1543
    %v1844 = vunpack.c.l.b16 %v1544
    %v1845 = vunpack.c.l.b16 %v1545
    %v1846 = vunpack.c.l.b16 %v1546
    %v1847 = vunpack.c.l.b16 %v1547
    %v1848 = vunpack.c.l.b16 %v1548
    %v1849 = vunpack.c.l.b16 %v1549
    %v1850 = vunpack.c.l.b16 %v1550
    %v1851 = vunpack.c.l.b16 %v1551
    %v1852 = vunpack.c.l.b16 %v1552
    %v1853 = vunpack.c.l.b16 %v1553
    %v1854 = vunpack.c.l.b16 %v1554
    %v1855 = vunpack.c.l.b16 %v1555
    %v1856 = vunpack.c.l.b16 %v1556
    %v1857 = vunpack.c.l.b16 %v1557
    %v1858 = vunpack.c.l.b16 %v1558
    %v1859 = vunpack.c.l.b16 %v1559
    %v1860 = vunpack.c.l.b16 %v1560
    %v1861 = vunpack.c.l.b16 %v1561
    %v1862 = vunpack.c.l.b16 %v1562
    %v1863 = vunpack.c.l.b16 %v1563
    %v1864 = vunpack.c.l.b16 %v1564
    %v1865 = vunpack.c.l.b16 %v1565
    %v1866 = vunpack.c.l.b16 %v1566
    %v1867 = vunpack.c.l.b16 %v1567
    %v1868 = vunpack.c.l.b16 %v1568
    %v1869 = vunpack.c.l.b16 %v1569
    %v1870 = vunpack.c.l.b16 %v1570
    %v1871 = vunpack.c.l.b16 %v1571
    %v1872 = vunpack.c.l.b16 %v1572
    %v1873 = vunpack.c.l.b16 %v1573
    %v1874 = vunpack.c.l.b16 %v1574
    %v1875 = vunpack.c.l.b16 %v1575
    %v1876 = vunpack.c.l.b16 %v1576
    %v1877 = vunpack.c.l.b16 %v1577
    %v1878 = vunpack.c.l.b16 %v1578
    %v1879 = vunpack.c.l.b16 %v1579
    %v1880 = vunpack.c.l.b16 %v1580
    %v1881 = vunpack.c.l.b16 %v1581
    %v1882 = vunpack.c.l.b16 %v1582
    %v1883 = vunpack.c.l.b16 %v1583
    %v1884 = vunpack.c.l.b16 %v1584
    %v1885 = vunpack.c.l.b16 %v1585
    %v1886 = vunpack.c.l.b16 %v1586
    %v1887 = vunpack.c.l.b16 %v1587
    %v1888 = vunpack.c.l.b16 %v1588
    %v1889 = vunpack.c.l.b16 %v1589
    %v1890 = vunpack.c.l.b16 %v1590
    %v1891 = vunpack.c.l.b16 %v1591
    %v1892 = vpack.c.b16 %v1765, %v1764
    %v1893 = vpack.c.b16 %v1767, %v1766
    %v1894 = vpack.c.b16 %v1769, %v1768
    %v1895 = vpack.c.b16 %v1771, %v1770
    %v1896 = vpack.c.b16 %v1773, %v1772
    %v1897 = vpack.c.b16 %v1775, %v1774
    %v1898 = vpack.c.b16 %v1777, %v1776
    %v1899 = vpack.c.b16 %v1779, %v1778
    %v1900 = vpack.c.b16 %v1781, %v1780
    %v1901 = vpack.c.b16 %v1783, %v1782
    %v1902 = vpack.c.b16 %v1785, %v1784
    %v1903 = vpack.c.b16 %v1787, %v1786
    %v1904 = vpack.c.b16 %v1789, %v1788
    %v1905 = vpack.c.b16 %v1791, %v1790
    %v1906 = vpack.c.b16 %v1793, %v1792
    %v1907 = vpack.c.b16 %v1795, %v1794
    %v1908 = vpack.c.b16 %v1797, %v1796
    %v1909 = vpack.c.b16 %v1799, %v1798
    %v1910 = vpack.c.b16 %v1801, %v1800
    %v1911 = vpack.c.b16 %v1803, %v1802
    %v1912 = vpack.c.b16 %v1805, %v1804
    %v1913 = vpack.c.b16 %v1807, %v1806
    %v1914 = vpack.c.b16 %v1809, %v1808
    %v1915 = vpack.c.b16 %v1811, %v1810
    %v1916 = vpack.c.b16 %v1813, %v1812
    %v1917 = vpack.c.b16 %v1815, %v1814
    %v1918 = vpack.c.b16 %v1817, %v1816
    %v1919 = vpack.c.b16 %v1819, %v1818
    %v1920 = vpack.c.b16 %v1821, %v1820
    %v1921 = vpack.c.b16 %v1823, %v1822
    %v1922 = vpack.c.b16 %v1825, %v1824
    %v1923 = vpack.c.b16 %v1827, %v1826
    %v1924 = vpack.c.b16 %v1829, %v1828
    %v1925 = vpack.c.b16 %v1831, %v1830
    %v1926 = vpack.c.b16 %v1833, %v1832
    %v1927 = vpack.c.b16 %v1835, %v1834
    %v1928 = vpack.c.b16 %v1837, %v1836
    %v1929 = vpack.c.b16 %v1839, %v1838
    %v1930 = vpack.c.b16 %v1841, %v1840
    %v1931 = vpack.c.b16 %v1843, %v1842
    %v1932 = vpack.c.b16 %v1845, %v1844
    %v1933 = vpack.c.b16 %v1847, %v1846
    %v1934 = vpack.c.b16 %v1849, %v1848
    %v1935 = vpack.c.b16 %v1851, %v1850
    %v1936 = vpack.c.b16 %v1853, %v1852
    %v1937 = vpack.c.b16 %v1855, %v1854
    %v1938 = vpack.c.b16 %v1857, %v1856
    %v1939 = vpack.c.b16 %v1859, %v1858
    %v1940 = vpack.c.b16 %v1861, %v1860
    %v1941 = vpack.c.b16 %v1863, %v1862
    %v1942 = vpack.c.b16 %v1865, %v1864
    %v1943 = vpack.c.b16 %v1867, %v1866
    %v1944 = vpack.c.b16 %v1869, %v1868
    %v1945 = vpack.c.b16 %v1871, %v1870
    %v1946 = vpack.c.b16 %v1873, %v1872
    %v1947 = vpack.c.b16 %v1875, %v1874
    %v1948 = vpack.c.b16 %v1877, %v1876
    %v1949 = vpack.c.b16 %v1879, %v1878
    %v1950 = vpack.c.b16 %v1881, %v1880
    %v1951 = vpack.c.b16 %v1883, %v1882
    %v1952 = vpack.c.b16 %v1885, %v1884
    %v1953 = vpack.c.b16 %v1887, %v1886
    %v1954 = vpack.c.b16 %v1889, %v1888
    %v1955 = vpack.c.b16 %v1891, %v1890
    %2020 = vmatpush.bf16.msra.mxu0 %v1899
    %2021 = vmatpush.bf16.msra.mxu0 %v1898
    %2022 = vmatpush.bf16.msra.mxu0 %v1897
    %2023 = vmatpush.bf16.msra.mxu0 %v1896
    %2024 = vmatpush.bf16.msra.mxu0 %v1895
    %2025 = vmatpush.bf16.msra.mxu0 %v1894
    %2026 = vmatpush.bf16.msra.mxu0 %v1893
    %2027 = vmatpush.bf16.msra.mxu0 %v1892
    %2028 = vmatmul.bf16.gmra.mxu0 %v1620
    %v2029 = vpop.f32.mrf.mxu0
    %v2030 = vadd.f32 %v1594, %v2029
    %v2031 = vpop.f32.mrf.mxu0
    %v2032 = vadd.f32 %v1594, %v2031
    %2033 = vdwg.mxu0
    %2034 = vmatpush.bf16.msra.mxu0 %v1907
    %2035 = vmatpush.bf16.msra.mxu0 %v1906
    %2036 = vmatpush.bf16.msra.mxu0 %v1905
    %2037 = vmatpush.bf16.msra.mxu0 %v1904
    %2038 = vmatpush.bf16.msra.mxu0 %v1903
    %2039 = vmatpush.bf16.msra.mxu0 %v1902
    %2040 = vmatpush.bf16.msra.mxu0 %v1901
    %2041 = vmatpush.bf16.msra.mxu0 %v1900
    %2042 = vmatmul.bf16.gmra.mxu0 %v1621
    %v2043 = vpop.f32.mrf.mxu0
    %v2044 = vadd.f32 %v2030, %v2043
    %v2045 = vpop.f32.mrf.mxu0
    %v2046 = vadd.f32 %v2032, %v2045
    %2047 = vdwg.mxu0
    %2048 = vmatpush.bf16.msra.mxu0 %v1915
    %2049 = vmatpush.bf16.msra.mxu0 %v1914
    %2050 = vmatpush.bf16.msra.mxu0 %v1913
    %2051 = vmatpush.bf16.msra.mxu0 %v1912
    %2052 = vmatpush.bf16.msra.mxu0 %v1911
    %2053 = vmatpush.bf16.msra.mxu0 %v1910
    %2054 = vmatpush.bf16.msra.mxu0 %v1909
    %2055 = vmatpush.bf16.msra.mxu0 %v1908
    %2056 = vmatmul.bf16.gmra.mxu0 %v1622
    %v2057 = vpop.f32.mrf.mxu0
    %v2058 = vadd.f32 %v2044, %v2057
    %v2059 = vpop.f32.mrf.mxu0
    %v2060 = vadd.f32 %v2046, %v2059
    %2061 = vdwg.mxu0
    %2062 = vmatpush.bf16.msra.mxu0 %v1923
    %2063 = vmatpush.bf16.msra.mxu0 %v1922
    %2064 = vmatpush.bf16.msra.mxu0 %v1921
    %2065 = vmatpush.bf16.msra.mxu0 %v1920
    %2066 = vmatpush.bf16.msra.mxu0 %v1919
    %2067 = vmatpush.bf16.msra.mxu0 %v1918
    %2068 = vmatpush.bf16.msra.mxu0 %v1917
    %2069 = vmatpush.bf16.msra.mxu0 %v1916
    %2070 = vmatmul.bf16.gmra.mxu0 %v1623
    %v2071 = vpop.f32.mrf.mxu0
    %v2072 = vadd.f32 %v2058, %v2071
    %v2073 = vpop.f32.mrf.mxu0
    %v2074 = vadd.f32 %v2060, %v2073
    %2075 = vdwg.mxu0
    %2076 = vmatpush.bf16.msra.mxu0 %v1931
    %2077 = vmatpush.bf16.msra.mxu0 %v1930
    %2078 = vmatpush.bf16.msra.mxu0 %v1929
    %2079 = vmatpush.bf16.msra.mxu0 %v1928
    %2080 = vmatpush.bf16.msra.mxu0 %v1927
    %2081 = vmatpush.bf16.msra.mxu0 %v1926
    %2082 = vmatpush.bf16.msra.mxu0 %v1925
    %2083 = vmatpush.bf16.msra.mxu0 %v1924
    %2084 = vmatmul.bf16.gmra.mxu0 %v1624
    %v2085 = vpop.f32.mrf.mxu0
    %v2086 = vadd.f32 %v2072, %v2085
    %v2087 = vpop.f32.mrf.mxu0
    %v2088 = vadd.f32 %v2074, %v2087
    %2089 = vdwg.mxu0
    %2090 = vmatpush.bf16.msra.mxu0 %v1939
    %2091 = vmatpush.bf16.msra.mxu0 %v1938
    %2092 = vmatpush.bf16.msra.mxu0 %v1937
    %2093 = vmatpush.bf16.msra.mxu0 %v1936
    %2094 = vmatpush.bf16.msra.mxu0 %v1935
    %2095 = vmatpush.bf16.msra.mxu0 %v1934
    %2096 = vmatpush.bf16.msra.mxu0 %v1933
    %2097 = vmatpush.bf16.msra.mxu0 %v1932
    %2098 = vmatmul.bf16.gmra.mxu0 %v1625
    %v2099 = vpop.f32.mrf.mxu0
    %v2100 = vadd.f32 %v2086, %v2099
    %v2101 = vpop.f32.mrf.mxu0
    %v2102 = vadd.f32 %v2088, %v2101
    %2103 = vdwg.mxu0
    %2104 = vmatpush.bf16.msra.mxu0 %v1947
    %2105 = vmatpush.bf16.msra.mxu0 %v1946
    %2106 = vmatpush.bf16.msra.mxu0 %v1945
    %2107 = vmatpush.bf16.msra.mxu0 %v1944
    %2108 = vmatpush.bf16.msra.mxu0 %v1943
    %2109 = vmatpush.bf16.msra.mxu0 %v1942
    %2110 = vmatpush.bf16.msra.mxu0 %v1941
    %2111 = vmatpush.bf16.msra.mxu0 %v1940
    %2112 = vmatmul.bf16.gmra.mxu0 %v1626
    %v2113 = vpop.f32.mrf.mxu0
    %v2114 = vadd.f32 %v2100, %v2113
    %v2115 = vpop.f32.mrf.mxu0
    %v2116 = vadd.f32 %v2102, %v2115
    %2117 = vdwg.mxu0
    %2118 = vmatpush.bf16.msra.mxu0 %v1955
    %2119 = vmatpush.bf16.msra.mxu0 %v1954
    %2120 = vmatpush.bf16.msra.mxu0 %v1953
    %2121 = vmatpush.bf16.msra.mxu0 %v1952
    %2122 = vmatpush.bf16.msra.mxu0 %v1951
    %2123 = vmatpush.bf16.msra.mxu0 %v1950
    %2124 = vmatpush.bf16.msra.mxu0 %v1949
    %2125 = vmatpush.bf16.msra.mxu0 %v1948
    %2126 = vmatmul.bf16.gmra.mxu0 %v1627
    %v2127 = vpop.f32.mrf.mxu0
    %v2128 = vadd.f32 %v2114, %v2127
    %v2129 = vpop.f32.mrf.mxu0
    %v2130 = vadd.f32 %v2116, %v2129
    %2131 = vdwg.mxu0
    %2132 = vmax.xlane.f32.xlu0 %v2128
    %v2133 = vpop.xlane.xlu0 %2132
    %2134 = vmax.xlane.f32.xlu0 %v2130
    %v2135 = vpop.xlane.xlu0 %2134
    %v2136 = vsub.f32 %v2128, %v2133
    %v2137 = vsub.f32 %v2130, %v2135
    %v2138 = vmul.f32 %v2136, 1.442695
    %v2139 = vpow.pop %v2138
    %v2140 = vmul.f32 %v2137, 1.442695
    %v2141 = vpow.pop %v2140
    %2142 = vadd.xlane.f32.xlu0 %v2139
    %v2143 = vpop.xlane.xlu0 %2142
    %2144 = vadd.xlane.f32.xlu0 %v2141
    %v2145 = vpop.xlane.xlu0 %2144
    %v2146 = vrcp.pop %v2143
    %v2147 = vrcp.pop %v2145
    %v2148 = vmul.f32 %v2139, %v2146
    %v2149 = vmul.f32 %v2141, %v2147
    %v2150 = vld [vmem:[#allocation8] sm:$0xff]
    %v2151 = vld [vmem:[#allocation8 + $0x8] sm:$0xff]
    %v2152 = vadd.f32 %v2150, %v2148
    %v2153 = vadd.f32 %v2151, %v2149
    %2154 = vst [vmem:[#allocation8] sm:$0xff] %v2152
    %2155 = vst [vmem:[#allocation8 + $0x8] sm:$0xff] %v2153
    // Predicated region
    $region26: #{tpu_custom_call.1} parent=1 // pred_check
      _
    $region27: #{tpu_custom_call.1} parent=1 // pred_check_branch
      %2157 = sbr.rel (0) target = $region29
    $region28: #{tpu_custom_call.1} parent=1 // pred_region
      %2159 = vsyncadd [#allocation4], 0
      %s2160 = sshll.u32 [#allocation8], 4
      %s2161 = int_to_ptr.vmem [resolvable:$true] %s2160
      %s2162 = sshll.u32 %s3, 4
      %s2163 = int_to_ptr.hbm [resolvable:$true] %s2162
      %2168 = dma.vmem_to_hbm [thread:$0]  %s2161, 256, %s2163, [#allocation4], 128, 128, 8
    $region29: #{tpu_custom_call.1} parent=1 // pred_fallthru
      _
    // Predicated region
    $region30: #{tpu_custom_call.1} parent=1 // pred_check
      _
    $region31: #{tpu_custom_call.1} parent=1 // pred_check_branch
      %2170 = sbr.rel (0) target = $region33
    $region32: #{tpu_custom_call.1} parent=1 // pred_region
      %2172 = dma.done [#allocation4], 256
    $region33: #{tpu_custom_call.1} parent=1 // pred_fallthru
      _
    %2173 = vsyncpa [#allocation3], 1
    %2174 = vsyncpa [#allocation6], 1
    %2175 = vsyncpa [#allocation4], 1

</llo_original>
